<compile_context>
chip_gen: v7x
topology: tpu7x:2x2x1
jax: 0.10.0
libtpu: 0.0.40
codegen_flags: <defaults>
</compile_context>

<pallas_src>
import math

import jax
import jax.numpy as jnp
from jax import lax
from jax.experimental import pallas as pl
from jax.experimental.pallas import tpu as pltpu

# ----------------------------- config -----------------------------
S = 8                 # sequence length
D = 32                # d_model
NHEAD = 4
HD = D // NHEAD       # 8
FF = 64               # dim_feedforward
EPS = 1e-5

BLK_B = 4             # sequences per grid step -> 4 * 32 = 128 lanes (lane-dense blocks)
LW = BLK_B * D        # 128
FW = BLK_B * FF       # 256
G = BLK_B * NHEAD     # 16 (sequence, head) groups per block
MW = 2 * LW           # packed misc row width (256)

assert S == HD, "single (8x8)-block group mask reused for QK mask, group-sum and PV mask"


# ----------------------------- kernel -----------------------------
def encoder_layer_kernel(x_ref, pos_ref,
                         w_qk_ref,    # (LW, 2*LW) block-diag [Wq | Wk], Wq pre-scaled by 1/sqrt(HD)
                         w_v_ref,     # (LW, LW)   block-diag Wv
                         w_o_ref,     # (LW, LW)   block-diag out-proj
                         w1_ref,      # (LW, FW)   block-diag linear1
                         w2_ref,      # (FW, LW)   block-diag linear2
                         amask_ref,   # (G*S, G*S) constant 0/1 group mask (8x8 blocks on diagonal)
                         lnm_ref,     # (LW, LW)   block-diag per-sequence averaging matrix (1/D blocks)
                         misc_ref,    # (9, MW)    packed biases / LayerNorm params (tiled per sequence)
                         out_ref):    # (S, LW)
    # ---- unpack packed small params (broadcasting (1, n) rows) ----
    b_qk = misc_ref[0:1, :]
    b_v = misc_ref[1:2, :LW]
    b_o = misc_ref[2:3, :LW]
    b1 = misc_ref[3:4, :FW]
    b2 = misc_ref[4:5, :LW]
    g1 = misc_ref[5:6, :LW]
    be1 = misc_ref[6:7, :LW]
    g2 = misc_ref[7:8, :LW]
    be2 = misc_ref[8:9, :LW]

    x = x_ref[...]                    # (S, LW): sequence j of the block lives on lanes [j*D, (j+1)*D)
    qk_in = x + pos_ref[...]          # q = k = src + pos
    amask = amask_ref[...]
    lnm = lnm_ref[...]

    # ---- fused q|k and v projections directly on the interleaved layout ----
    qk = jnp.dot(qk_in, w_qk_ref[...], preferred_element_type=jnp.float32) + b_qk   # (S, 2*LW)
    q = qk[:, :LW]                    # lane layout: group g=(seq,head) occupies lanes [g*HD, (g+1)*HD)
    k = qk[:, LW:]
    v = jnp.dot(x, w_v_ref[...], preferred_element_type=jnp.float32) + b_v          # (S, LW)

    # ---- attention: one dense QK^T and one dense PV for all G groups ----
    # Group-block-diagonal K / V: row (g*S + s2) = key/value token s2 masked to group g's lanes.
    k_bd = jnp.broadcast_to(k[None], (G, S, LW)).reshape(G * S, LW) * amask         # (G*S, LW)
    v_bd = jnp.broadcast_to(v[None], (G, S, LW)).reshape(G * S, LW) * amask
    # scores[s1, g*S+s2] = <q_g[s1], k_g[s2]>   (contract last dims: q @ k_bd^T)
    scores = lax.dot_general(q, k_bd, (((1,), (1,)), ((), ())),
                             preferred_element_type=jnp.float32)                    # (S, G*S)
    m = jnp.max(scores, axis=-1, keepdims=True)     # per-query row max (constant over each group -> exact)
    p = jnp.exp(scores - m)
    denom = jnp.dot(p, amask, preferred_element_type=jnp.float32)                   # per-group sums, broadcast
    p = p * pl.reciprocal(denom, approx=True)       # EUP reciprocal
    attn = jnp.dot(p, v_bd, preferred_element_type=jnp.float32)                     # (S, LW), heads merged in place
    attn = jnp.dot(attn, w_o_ref[...], preferred_element_type=jnp.float32) + b_o

    # ---- residual + LayerNorm1 (stats via block-diag averaging matmul, no XLU reductions) ----
    y = x + attn
    mu = jnp.dot(y, lnm, preferred_element_type=jnp.float32)
    yc = y - mu
    var = jnp.dot(yc * yc, lnm, preferred_element_type=jnp.float32)
    y = yc * lax.rsqrt(var + EPS) * g1 + be1

    # ---- FFN (relu) + residual + LayerNorm2 ----
    h = jnp.maximum(jnp.dot(y, w1_ref[...], preferred_element_type=jnp.float32) + b1, 0.0)  # (S, FW)
    ff = jnp.dot(h, w2_ref[...], preferred_element_type=jnp.float32) + b2
    z = y + ff
    mu2 = jnp.dot(z, lnm, preferred_element_type=jnp.float32)
    zc = z - mu2
    var2 = jnp.dot(zc * zc, lnm, preferred_element_type=jnp.float32)
    out_ref[...] = zc * lax.rsqrt(var2 + EPS) * g2 + be2          # lane-dense (8, 128) store


# ----------------------------- parameter prep (one-time) -----------------------------
def prepare_params(params):
    """Pre-transpose / pre-scale / block-diagonalize / pack parameters for the kernel."""
    f32 = jnp.float32
    scale = 1.0 / math.sqrt(HD)
    w_in = params["in_proj_weight"].astype(f32)      # (3D, D), PyTorch (out, in)
    b_in = params["in_proj_bias"].astype(f32)

    w_q = w_in[:D].T * scale                          # fold 1/sqrt(HD) into q
    w_k = w_in[D:2 * D].T
    w_v = w_in[2 * D:].T
    b_q = b_in[:D] * scale
    b_k = b_in[D:2 * D]
    b_v = b_in[2 * D:]

    eye = jnp.eye(BLK_B, dtype=f32)
    bd = lambda w: jnp.kron(eye, w)                   # block-diagonal over the BLK_B sequences
    tl = lambda v: jnp.tile(v, BLK_B)                 # matching bias tiling

    w_qk = jnp.concatenate([bd(w_q), bd(w_k)], axis=1)              # (LW, 2*LW)
    w_v_bd = bd(w_v)                                                 # (LW, LW)
    w_o_bd = bd(params["out_proj_weight"].astype(f32).T)             # (LW, LW)
    w1_bd = bd(params["linear1_weight"].astype(f32).T)               # (LW, FW)
    w2_bd = bd(params["linear2_weight"].astype(f32).T)               # (FW, LW)

    # constant structure matrices (shared by all grid steps)
    amask = jnp.kron(jnp.eye(G, dtype=f32), jnp.ones((S, S), f32))   # (G*S, G*S) = (128, 128)
    lnmean = jnp.kron(eye, jnp.full((D, D), 1.0 / D, f32))           # (LW, LW)

    def row(vv):
        return jnp.pad(vv, (0, MW - vv.shape[0]))[None, :]

    misc = jnp.concatenate([
        row(jnp.concatenate([tl(b_q), tl(b_k)])),                    # 0: fused q|k bias (2*LW,)
        row(tl(b_v)),                                                # 1
        row(tl(params["out_proj_bias"].astype(f32))),                # 2
        row(tl(params["linear1_bias"].astype(f32))),                 # 3: (FW,)
        row(tl(params["linear2_bias"].astype(f32))),                 # 4
        row(tl(params["norm1_weight"].astype(f32))),                 # 5
        row(tl(params["norm1_bias"].astype(f32))),                   # 6
        row(tl(params["norm2_weight"].astype(f32))),                 # 7
        row(tl(params["norm2_bias"].astype(f32))),                   # 8
    ], axis=0)                                                       # (9, MW)

    return dict(w_qk=w_qk, w_v=w_v_bd, w_o=w_o_bd, w1=w1_bd, w2=w2_bd,
                amask=amask, lnmean=lnmean, misc=misc)


# ----------------------------- wrapper -----------------------------
def transformer_encoder_layer(src, pos, prep):
    """src, pos: (S, B, D). Returns (S, B, D). B padded internally to a multiple of BLK_B."""
    S_, B_, D_ = src.shape
    assert S_ == S and D_ == D
    pad = (-B_) % BLK_B
    srcf = src.astype(jnp.float32)
    posf = pos.astype(jnp.float32)
    if pad:
        srcf = jnp.pad(srcf, ((0, 0), (0, pad), (0, 0)))
        posf = jnp.pad(posf, ((0, 0), (0, pad), (0, 0)))
    Bp = B_ + pad

    # contiguous reshapes only (no transposes)
    src2d = srcf.reshape(S, Bp * D)
    pos2d = posf.reshape(S, Bp * D)
    nblk = Bp // BLK_B

    seq_spec = pl.BlockSpec((S, LW), lambda i: (0, i))               # walks 4 sequences per step
    const = lambda a: pl.BlockSpec(a.shape, lambda i: (0, 0))        # weights resident across steps

    out2d = pl.pallas_call(
        encoder_layer_kernel,
        out_shape=jax.ShapeDtypeStruct((S, Bp * D), jnp.float32),
        grid=(nblk,),
        in_specs=[seq_spec, seq_spec,
                  const(prep["w_qk"]), const(prep["w_v"]), const(prep["w_o"]),
                  const(prep["w1"]), const(prep["w2"]),
                  const(prep["amask"]), const(prep["lnmean"]), const(prep["misc"])],
        out_specs=pl.BlockSpec((S, LW), lambda i: (0, i)),
        compiler_params=pltpu.CompilerParams(dimension_semantics=("parallel",)),
    )(src2d, pos2d, prep["w_qk"], prep["w_v"], prep["w_o"], prep["w1"], prep["w2"],
      prep["amask"], prep["lnmean"], prep["misc"])

    out = out2d.reshape(S, Bp, D)
    return out[:, :B_, :] if pad else out


# ----------------------------- reference (plain JAX, high precision) -----------------------------
def reference(src, pos, params):
    PREC = jax.lax.Precision.HIGHEST
    S_, B_, _ = src.shape

    def layer_norm(x, g, b):
        mu = jnp.mean(x, axis=-1, keepdims=True)
        var = jnp.mean((x - mu) ** 2, axis=-1, keepdims=True)
        return (x - mu) / jnp.sqrt(var + EPS) * g + b

    qk = src + pos
    w_in, b_in = params["in_proj_weight"], params["in_proj_bias"]
    q = jnp.matmul(qk, w_in[:D].T, precision=PREC) + b_in[:D]
    k = jnp.matmul(qk, w_in[D:2 * D].T, precision=PREC) + b_in[D:2 * D]
    v = jnp.matmul(src, w_in[2 * D:].T, precision=PREC) + b_in[2 * D:]

    def split_heads(t):                                   # (S, B, D) -> (B, H, S, HD)
        return jnp.transpose(t.reshape(S_, B_, NHEAD, HD), (1, 2, 0, 3))

    qh, kh, vh = split_heads(q), split_heads(k), split_heads(v)
    scores = jnp.einsum("bhqd,bhkd->bhqk", qh, kh, precision=PREC) / math.sqrt(HD)
    p = jax.nn.softmax(scores, axis=-1)
    o = jnp.einsum("bhqk,bhkd->bhqd", p, vh, precision=PREC)
    o = jnp.transpose(o, (2, 0, 1, 3)).reshape(S_, B_, D)
    attn = jnp.matmul(o, params["out_proj_weight"].T, precision=PREC) + params["out_proj_bias"]

    y = layer_norm(src + attn, params["norm1_weight"], params["norm1_bias"])
    h1 = jnp.maximum(jnp.matmul(y, params["linear1_weight"].T, precision=PREC)
                     + params["linear1_bias"], 0.0)
    ff = jnp.matmul(h1, params["linear2_weight"].T, precision=PREC) + params["linear2_bias"]
    return layer_norm(y + ff, params["norm2_weight"], params["norm2_bias"])


# ----------------------------- main -----------------------------
if __name__ == "__main__":
    key = jax.random.PRNGKey(0)
    ks = jax.random.split(key, 16)

    params = {
        "in_proj_weight":  jax.random.normal(ks[0], (3 * D, D), jnp.float32) * 0.1,
        "in_proj_bias":    jax.random.normal(ks[1], (3 * D,),   jnp.float32) * 0.1,
        "out_proj_weight": jax.random.normal(ks[2], (D, D),     jnp.float32) * 0.1,
        "out_proj_bias":   jax.random.normal(ks[3], (D,),       jnp.float32) * 0.1,
        "linear1_weight":  jax.random.normal(ks[4], (FF, D),    jnp.float32) * 0.1,
        "linear1_bias":    jax.random.normal(ks[5], (FF,),      jnp.float32) * 0.1,
        "linear2_weight":  jax.random.normal(ks[6], (D, FF),    jnp.float32) * 0.1,
        "linear2_bias":    jax.random.normal(ks[7], (D,),       jnp.float32) * 0.1,
        "norm1_weight":    1.0 + 0.1 * jax.random.normal(ks[10], (D,), jnp.float32),
        "norm1_bias":      0.1 * jax.random.normal(ks[11], (D,), jnp.float32),
        "norm2_weight":    1.0 + 0.1 * jax.random.normal(ks[12], (D,), jnp.float32),
        "norm2_bias":      0.1 * jax.random.normal(ks[13], (D,), jnp.float32),
    }

    B = 8  # batch of independent sequences -> grid=(2,) blocks of 4 sequences each
    src = jax.random.normal(ks[8], (S, B, D), jnp.float32)
    pos = jax.random.normal(ks[9], (S, B, D), jnp.float32)

    prep = prepare_params(params)
    out = transformer_encoder_layer(src, pos, prep)
    out = jax.block_until_ready(out)

    ref = reference(src, pos, params)
    assert out.shape == (S, B, D)
    err = float(jnp.max(jnp.abs(out - ref)))
    # tolerance budget: approx (EUP) reciprocal in softmax + MXU f32 accumulation differences
    assert jnp.allclose(out, ref, atol=2e-3, rtol=2e-3), f"max abs err = {err}"

    print("KERNEL_OK")
</pallas_src>

<mosaic_0001>
module attributes {stable_mosaic.version = 11 : i64} {
  func.func @encoder_layer_kernel(%arg0: i32, %arg1: memref<8x128xf32, #tpu.memory_space<vmem>>, %arg2: memref<8x128xf32, #tpu.memory_space<vmem>>, %arg3: memref<128x256xf32, #tpu.memory_space<vmem>>, %arg4: memref<128x128xf32, #tpu.memory_space<vmem>>, %arg5: memref<128x128xf32, #tpu.memory_space<vmem>>, %arg6: memref<128x256xf32, #tpu.memory_space<vmem>>, %arg7: memref<256x128xf32, #tpu.memory_space<vmem>>, %arg8: memref<128x128xf32, #tpu.memory_space<vmem>>, %arg9: memref<128x128xf32, #tpu.memory_space<vmem>>, %arg10: memref<9x256xf32, #tpu.memory_space<vmem>>, %arg11: memref<8x128xf32, #tpu.memory_space<vmem>>) attributes {dimension_semantics = [#tpu.dimension_semantics<parallel>], iteration_bounds = array<i64: 2>, scalar_prefetch = 0 : i64, scratch_operands = 0 : i64, tpu.core_type = #tpu.core_type<tc>, window_params = [{transform_indices = @transform_0, window_bounds = array<i64: 8, 128>}, {transform_indices = @transform_1, window_bounds = array<i64: 8, 128>}, {pipeline_mode = #tpu.pipeline_mode<synchronous>, transform_indices = @transform_2, window_bounds = array<i64: 128, 256>}, {pipeline_mode = #tpu.pipeline_mode<synchronous>, transform_indices = @transform_3, window_bounds = array<i64: 128, 128>}, {pipeline_mode = #tpu.pipeline_mode<synchronous>, transform_indices = @transform_4, window_bounds = array<i64: 128, 128>}, {pipeline_mode = #tpu.pipeline_mode<synchronous>, transform_indices = @transform_5, window_bounds = array<i64: 128, 256>}, {pipeline_mode = #tpu.pipeline_mode<synchronous>, transform_indices = @transform_6, window_bounds = array<i64: 256, 128>}, {pipeline_mode = #tpu.pipeline_mode<synchronous>, transform_indices = @transform_7, window_bounds = array<i64: 128, 128>}, {pipeline_mode = #tpu.pipeline_mode<synchronous>, transform_indices = @transform_8, window_bounds = array<i64: 128, 128>}, {pipeline_mode = #tpu.pipeline_mode<synchronous>, transform_indices = @transform_9, window_bounds = array<i64: 9, 256>}, {transform_indices = @transform_10, window_bounds = array<i64: 8, 128>}]} {
    %c0 = arith.constant 0 : index
    %c0_0 = arith.constant 0 : index
    %0 = vector.load %arg10[%c0, %c0_0] : memref<9x256xf32, #tpu.memory_space<vmem>>, vector<1x256xf32>
    %c1 = arith.constant 1 : index
    %c0_1 = arith.constant 0 : index
    %1 = vector.load %arg10[%c1, %c0_1] : memref<9x256xf32, #tpu.memory_space<vmem>>, vector<1x128xf32>
    %c2 = arith.constant 2 : index
    %c0_2 = arith.constant 0 : index
    %2 = vector.load %arg10[%c2, %c0_2] : memref<9x256xf32, #tpu.memory_space<vmem>>, vector<1x128xf32>
    %c3 = arith.constant 3 : index
    %c0_3 = arith.constant 0 : index
    %3 = vector.load %arg10[%c3, %c0_3] : memref<9x256xf32, #tpu.memory_space<vmem>>, vector<1x256xf32>
    %c4 = arith.constant 4 : index
    %c0_4 = arith.constant 0 : index
    %4 = vector.load %arg10[%c4, %c0_4] : memref<9x256xf32, #tpu.memory_space<vmem>>, vector<1x128xf32>
    %c5 = arith.constant 5 : index
    %c0_5 = arith.constant 0 : index
    %5 = vector.load %arg10[%c5, %c0_5] : memref<9x256xf32, #tpu.memory_space<vmem>>, vector<1x128xf32>
    %c6 = arith.constant 6 : index
    %c0_6 = arith.constant 0 : index
    %6 = vector.load %arg10[%c6, %c0_6] : memref<9x256xf32, #tpu.memory_space<vmem>>, vector<1x128xf32>
    %c7 = arith.constant 7 : index
    %c0_7 = arith.constant 0 : index
    %7 = vector.load %arg10[%c7, %c0_7] : memref<9x256xf32, #tpu.memory_space<vmem>>, vector<1x128xf32>
    %c8 = arith.constant 8 : index
    %c0_8 = arith.constant 0 : index
    %8 = vector.load %arg10[%c8, %c0_8] : memref<9x256xf32, #tpu.memory_space<vmem>>, vector<1x128xf32>
    %c0_9 = arith.constant 0 : index
    %c0_10 = arith.constant 0 : index
    %9 = vector.load %arg1[%c0_9, %c0_10] : memref<8x128xf32, #tpu.memory_space<vmem>>, vector<8x128xf32>
    %c0_11 = arith.constant 0 : index
    %c0_12 = arith.constant 0 : index
    %10 = vector.load %arg2[%c0_11, %c0_12] : memref<8x128xf32, #tpu.memory_space<vmem>>, vector<8x128xf32>
    %11 = arith.addf %9, %10 : vector<8x128xf32>
    %c0_13 = arith.constant 0 : index
    %c0_14 = arith.constant 0 : index
    %12 = vector.load %arg8[%c0_13, %c0_14] : memref<128x128xf32, #tpu.memory_space<vmem>>, vector<128x128xf32>
    %c0_15 = arith.constant 0 : index
    %c0_16 = arith.constant 0 : index
    %13 = vector.load %arg9[%c0_15, %c0_16] : memref<128x128xf32, #tpu.memory_space<vmem>>, vector<128x128xf32>
    %c0_17 = arith.constant 0 : index
    %c0_18 = arith.constant 0 : index
    %14 = vector.load %arg3[%c0_17, %c0_18] : memref<128x256xf32, #tpu.memory_space<vmem>>, vector<128x256xf32>
    %cst = arith.constant dense<0.000000e+00> : vector<8x256xf32>
    %15 = tpu.matmul %11, %14, %cst {dimension_numbers = #tpu.dot_dimension_numbers<[1], [0], [0], [1], [0, 0, 1, 1], [], []>} : vector<8x128xf32>, vector<128x256xf32>, vector<8x256xf32> -> vector<8x256xf32>
    %16 = vector.broadcast %0 : vector<1x256xf32> to vector<8x256xf32>
    %17 = arith.addf %15, %16 : vector<8x256xf32>
    %18 = vector.extract_strided_slice %17 {offsets = [0, 0], sizes = [8, 128], strides = [1, 1]} : vector<8x256xf32> to vector<8x128xf32>
    %19 = vector.extract_strided_slice %17 {offsets = [0, 128], sizes = [8, 128], strides = [1, 1]} : vector<8x256xf32> to vector<8x128xf32>
    %c0_19 = arith.constant 0 : index
    %c0_20 = arith.constant 0 : index
    %20 = vector.load %arg4[%c0_19, %c0_20] : memref<128x128xf32, #tpu.memory_space<vmem>>, vector<128x128xf32>
    %cst_21 = arith.constant dense<0.000000e+00> : vector<8x128xf32>
    %21 = tpu.matmul %9, %20, %cst_21 {dimension_numbers = #tpu.dot_dimension_numbers<[1], [0], [0], [1], [0, 0, 1, 1], [], []>} : vector<8x128xf32>, vector<128x128xf32>, vector<8x128xf32> -> vector<8x128xf32>
    %22 = vector.broadcast %1 : vector<1x128xf32> to vector<8x128xf32>
    %23 = arith.addf %21, %22 : vector<8x128xf32>
    %24 = vector.shape_cast %19 : vector<8x128xf32> to vector<1x8x128xf32>
    %25 = vector.shape_cast %24 : vector<1x8x128xf32> to vector<1x8x128xf32>
    %26 = vector.broadcast %25 : vector<1x8x128xf32> to vector<16x8x128xf32>
    %27 = vector.shape_cast %26 : vector<16x8x128xf32> to vector<128x128xf32>
    %28 = arith.mulf %27, %12 : vector<128x128xf32>
    %29 = vector.shape_cast %23 : vector<8x128xf32> to vector<1x8x128xf32>
    %30 = vector.shape_cast %29 : vector<1x8x128xf32> to vector<1x8x128xf32>
    %31 = vector.broadcast %30 : vector<1x8x128xf32> to vector<16x8x128xf32>
    %32 = vector.shape_cast %31 : vector<16x8x128xf32> to vector<128x128xf32>
    %33 = arith.mulf %32, %12 : vector<128x128xf32>
    %cst_22 = arith.constant dense<0.000000e+00> : vector<8x128xf32>
    %34 = tpu.matmul %18, %28, %cst_22 {dimension_numbers = #tpu.dot_dimension_numbers<[1], [1], [0], [0], [0, 0, 1, 0], [], []>} : vector<8x128xf32>, vector<128x128xf32>, vector<8x128xf32> -> vector<8x128xf32>
    %cst_23 = arith.constant dense<0xFF800000> : vector<8xf32>
    %35 = vector.multi_reduction <maximumf>, %34, %cst_23 [1] : vector<8x128xf32> to vector<8xf32>
    %36 = vector.shape_cast %35 : vector<8xf32> to vector<8x1xf32>
    %37 = vector.broadcast %36 : vector<8x1xf32> to vector<8x128xf32>
    %38 = arith.subf %34, %37 : vector<8x128xf32>
    %39 = math.exp %38 : vector<8x128xf32>
    %cst_24 = arith.constant dense<0.000000e+00> : vector<8x128xf32>
    %40 = tpu.matmul %39, %12, %cst_24 {dimension_numbers = #tpu.dot_dimension_numbers<[1], [0], [0], [1], [0, 0, 1, 1], [], []>} : vector<8x128xf32>, vector<128x128xf32>, vector<8x128xf32> -> vector<8x128xf32>
    %41 = tpu.reciprocal %40 {approx = true} : vector<8x128xf32> -> vector<8x128xf32>
    %42 = arith.mulf %39, %41 : vector<8x128xf32>
    %cst_25 = arith.constant dense<0.000000e+00> : vector<8x128xf32>
    %43 = tpu.matmul %42, %33, %cst_25 {dimension_numbers = #tpu.dot_dimension_numbers<[1], [0], [0], [1], [0, 0, 1, 1], [], []>} : vector<8x128xf32>, vector<128x128xf32>, vector<8x128xf32> -> vector<8x128xf32>
    %c0_26 = arith.constant 0 : index
    %c0_27 = arith.constant 0 : index
    %44 = vector.load %arg5[%c0_26, %c0_27] : memref<128x128xf32, #tpu.memory_space<vmem>>, vector<128x128xf32>
    %cst_28 = arith.constant dense<0.000000e+00> : vector<8x128xf32>
    %45 = tpu.matmul %43, %44, %cst_28 {dimension_numbers = #tpu.dot_dimension_numbers<[1], [0], [0], [1], [0, 0, 1, 1], [], []>} : vector<8x128xf32>, vector<128x128xf32>, vector<8x128xf32> -> vector<8x128xf32>
    %46 = vector.broadcast %2 : vector<1x128xf32> to vector<8x128xf32>
    %47 = arith.addf %45, %46 : vector<8x128xf32>
    %48 = arith.addf %9, %47 : vector<8x128xf32>
    %cst_29 = arith.constant dense<0.000000e+00> : vector<8x128xf32>
    %49 = tpu.matmul %48, %13, %cst_29 {dimension_numbers = #tpu.dot_dimension_numbers<[1], [0], [0], [1], [0, 0, 1, 1], [], []>} : vector<8x128xf32>, vector<128x128xf32>, vector<8x128xf32> -> vector<8x128xf32>
    %50 = arith.subf %48, %49 : vector<8x128xf32>
    %51 = arith.mulf %50, %50 : vector<8x128xf32>
    %cst_30 = arith.constant dense<0.000000e+00> : vector<8x128xf32>
    %52 = tpu.matmul %51, %13, %cst_30 {dimension_numbers = #tpu.dot_dimension_numbers<[1], [0], [0], [1], [0, 0, 1, 1], [], []>} : vector<8x128xf32>, vector<128x128xf32>, vector<8x128xf32> -> vector<8x128xf32>
    %cst_31 = arith.constant 9.99999974E-6 : f32
    %53 = vector.broadcast %cst_31 : f32 to vector<8x128xf32>
    %54 = arith.addf %52, %53 : vector<8x128xf32>
    %55 = math.rsqrt %54 : vector<8x128xf32>
    %56 = arith.mulf %50, %55 : vector<8x128xf32>
    %57 = vector.broadcast %5 : vector<1x128xf32> to vector<8x128xf32>
    %58 = arith.mulf %56, %57 : vector<8x128xf32>
    %59 = vector.broadcast %6 : vector<1x128xf32> to vector<8x128xf32>
    %60 = arith.addf %58, %59 : vector<8x128xf32>
    %c0_32 = arith.constant 0 : index
    %c0_33 = arith.constant 0 : index
    %61 = vector.load %arg6[%c0_32, %c0_33] : memref<128x256xf32, #tpu.memory_space<vmem>>, vector<128x256xf32>
    %cst_34 = arith.constant dense<0.000000e+00> : vector<8x256xf32>
    %62 = tpu.matmul %60, %61, %cst_34 {dimension_numbers = #tpu.dot_dimension_numbers<[1], [0], [0], [1], [0, 0, 1, 1], [], []>} : vector<8x128xf32>, vector<128x256xf32>, vector<8x256xf32> -> vector<8x256xf32>
    %63 = vector.broadcast %3 : vector<1x256xf32> to vector<8x256xf32>
    %64 = arith.addf %62, %63 : vector<8x256xf32>
    %cst_35 = arith.constant 0.000000e+00 : f32
    %65 = vector.broadcast %cst_35 : f32 to vector<8x256xf32>
    %66 = arith.maximumf %64, %65 : vector<8x256xf32>
    %c0_36 = arith.constant 0 : index
    %c0_37 = arith.constant 0 : index
    %67 = vector.load %arg7[%c0_36, %c0_37] : memref<256x128xf32, #tpu.memory_space<vmem>>, vector<256x128xf32>
    %cst_38 = arith.constant dense<0.000000e+00> : vector<8x128xf32>
    %68 = tpu.matmul %66, %67, %cst_38 {dimension_numbers = #tpu.dot_dimension_numbers<[1], [0], [0], [1], [0, 0, 1, 1], [], []>} : vector<8x256xf32>, vector<256x128xf32>, vector<8x128xf32> -> vector<8x128xf32>
    %69 = vector.broadcast %4 : vector<1x128xf32> to vector<8x128xf32>
    %70 = arith.addf %68, %69 : vector<8x128xf32>
    %71 = arith.addf %60, %70 : vector<8x128xf32>
    %cst_39 = arith.constant dense<0.000000e+00> : vector<8x128xf32>
    %72 = tpu.matmul %71, %13, %cst_39 {dimension_numbers = #tpu.dot_dimension_numbers<[1], [0], [0], [1], [0, 0, 1, 1], [], []>} : vector<8x128xf32>, vector<128x128xf32>, vector<8x128xf32> -> vector<8x128xf32>
    %73 = arith.subf %71, %72 : vector<8x128xf32>
    %74 = arith.mulf %73, %73 : vector<8x128xf32>
    %cst_40 = arith.constant dense<0.000000e+00> : vector<8x128xf32>
    %75 = tpu.matmul %74, %13, %cst_40 {dimension_numbers = #tpu.dot_dimension_numbers<[1], [0], [0], [1], [0, 0, 1, 1], [], []>} : vector<8x128xf32>, vector<128x128xf32>, vector<8x128xf32> -> vector<8x128xf32>
    %cst_41 = arith.constant 9.99999974E-6 : f32
    %76 = vector.broadcast %cst_41 : f32 to vector<8x128xf32>
    %77 = arith.addf %75, %76 : vector<8x128xf32>
    %78 = math.rsqrt %77 : vector<8x128xf32>
    %79 = arith.mulf %73, %78 : vector<8x128xf32>
    %80 = vector.broadcast %7 : vector<1x128xf32> to vector<8x128xf32>
    %81 = arith.mulf %79, %80 : vector<8x128xf32>
    %82 = vector.broadcast %8 : vector<1x128xf32> to vector<8x128xf32>
    %83 = arith.addf %81, %82 : vector<8x128xf32>
    %c0_42 = arith.constant 0 : index
    %c0_43 = arith.constant 0 : index
    %84 = vector.load %arg11[%c0_42, %c0_43] : memref<8x128xf32, #tpu.memory_space<vmem>>, vector<8x128xf32>
    tpu.vector_store %arg11[%c0_42, %c0_43], %83 {strides = array<i32>} : memref<8x128xf32, #tpu.memory_space<vmem>>, vector<8x128xf32>,
    return
  }
  func.func @transform_0(%arg0: i32) -> (i32, i32) {
    %c0_i32 = arith.constant 0 : i32
    %c0_i32_0 = arith.constant 0 : i32
    return %c0_i32, %arg0 : i32, i32
  }
  func.func @transform_1(%arg0: i32) -> (i32, i32) {
    %c0_i32 = arith.constant 0 : i32
    %c0_i32_0 = arith.constant 0 : i32
    return %c0_i32, %arg0 : i32, i32
  }
  func.func @transform_2(%arg0: i32) -> (i32, i32) {
    %c0_i32 = arith.constant 0 : i32
    %c0_i32_0 = arith.constant 0 : i32
    %c0_i32_1 = arith.constant 0 : i32
    return %c0_i32, %c0_i32_0 : i32, i32
  }
  func.func @transform_3(%arg0: i32) -> (i32, i32) {
    %c0_i32 = arith.constant 0 : i32
    %c0_i32_0 = arith.constant 0 : i32
    %c0_i32_1 = arith.constant 0 : i32
    return %c0_i32, %c0_i32_0 : i32, i32
  }
  func.func @transform_4(%arg0: i32) -> (i32, i32) {
    %c0_i32 = arith.constant 0 : i32
    %c0_i32_0 = arith.constant 0 : i32
    %c0_i32_1 = arith.constant 0 : i32
    return %c0_i32, %c0_i32_0 : i32, i32
  }
  func.func @transform_5(%arg0: i32) -> (i32, i32) {
    %c0_i32 = arith.constant 0 : i32
    %c0_i32_0 = arith.constant 0 : i32
    %c0_i32_1 = arith.constant 0 : i32
    return %c0_i32, %c0_i32_0 : i32, i32
  }
  func.func @transform_6(%arg0: i32) -> (i32, i32) {
    %c0_i32 = arith.constant 0 : i32
    %c0_i32_0 = arith.constant 0 : i32
    %c0_i32_1 = arith.constant 0 : i32
    return %c0_i32, %c0_i32_0 : i32, i32
  }
  func.func @transform_7(%arg0: i32) -> (i32, i32) {
    %c0_i32 = arith.constant 0 : i32
    %c0_i32_0 = arith.constant 0 : i32
    %c0_i32_1 = arith.constant 0 : i32
    return %c0_i32, %c0_i32_0 : i32, i32
  }
  func.func @transform_8(%arg0: i32) -> (i32, i32) {
    %c0_i32 = arith.constant 0 : i32
    %c0_i32_0 = arith.constant 0 : i32
    %c0_i32_1 = arith.constant 0 : i32
    return %c0_i32, %c0_i32_0 : i32, i32
  }
  func.func @transform_9(%arg0: i32) -> (i32, i32) {
    %c0_i32 = arith.constant 0 : i32
    %c0_i32_0 = arith.constant 0 : i32
    %c0_i32_1 = arith.constant 0 : i32
    return %c0_i32, %c0_i32_0 : i32, i32
  }
  func.func @transform_10(%arg0: i32) -> (i32, i32) {
    %c0_i32 = arith.constant 0 : i32
    %c0_i32_0 = arith.constant 0 : i32
    return %c0_i32, %arg0 : i32, i32
  }
}

</mosaic_0001>

<llo_original>
// kernel: tpu_custom_call.1
$region0: #{tpu_custom_call.1}
  #allocation0 [shape = 'u32[]', space=smem, size = 0x4, offset = 0x4, fixed_abs, tag = 'smem constant byte address 0x4 - core index']
  #allocation1 [shape = 'u32[144,128]{1,0:T(1,128)}', space=vmem, size = 0x12000, scoped, tag = 'internal scratch']
  %s0 = inlined_call_operand.hbm [shape: f32[8,256], index: 0, kind: input, shape index: {}]
  %s1 = inlined_call_operand.hbm [shape: f32[8,256], index: 1, kind: input, shape index: {}]
  %s2 = inlined_call_operand.hbm [shape: f32[128,256], index: 2, kind: input, shape index: {}]
  %s3 = inlined_call_operand.hbm [shape: f32[128,128], index: 3, kind: input, shape index: {}]
  %s4 = inlined_call_operand.hbm [shape: f32[128,128], index: 4, kind: input, shape index: {}]
  %s5 = inlined_call_operand.hbm [shape: f32[128,256], index: 5, kind: input, shape index: {}]
  %s6 = inlined_call_operand.hbm [shape: f32[256,128], index: 6, kind: input, shape index: {}]
  %s7 = inlined_call_operand.hbm [shape: f32[128,128], index: 7, kind: input, shape index: {}]
  %s8 = inlined_call_operand.hbm [shape: f32[128,128], index: 8, kind: input, shape index: {}]
  %s9 = inlined_call_operand.vmem [shape: f32[9,256], index: 9, kind: input, shape index: {}]
  %s10 = inlined_call_operand.hbm [shape: f32[8,256], index: 10, kind: output, shape index: {}]
  %s11 = sld [smem:[#allocation0]]
  $region109: #{tpu_custom_call.1} parent=0
    _
  %s13 = ssub.s32 1, %s11
  %s14 = scalar_select 0, %s13, %s11
  $region1: #{tpu_custom_call.1} parent=0
    #allocation2 [shape = 'u8[8192]{0}', space=vmem, size = 0x2000, scoped, tag = 'input window, operand 0']
    #allocation3 [shape = 's32[2]{0}', space=sflag, size = 0x8, scoped, tag = 'scoped memory for tpu_custom_call.1']
    #allocation4 [shape = 's32[2]{0}', space=sflag, size = 0x8, scoped, tag = 'scoped memory for tpu_custom_call.1']
    #allocation5 [shape = 'u8[8192]{0}', space=vmem, size = 0x2000, scoped, tag = 'input window, operand 1']
    #allocation6 [shape = 's32[2]{0}', space=sflag, size = 0x8, scoped, tag = 'scoped memory for tpu_custom_call.1']
    #allocation7 [shape = 'u8[131072]{0}', space=vmem, size = 0x20000, scoped, tag = 'input window, operand 2, single buffered']
    #allocation8 [shape = 'u8[65536]{0}', space=vmem, size = 0x10000, scoped, tag = 'input window, operand 3, single buffered']
    #allocation9 [shape = 's32[1]{0}', space=sflag, size = 0x4, scoped, tag = 'scoped memory for tpu_custom_call.1']
    #allocation10 [shape = 'u8[65536]{0}', space=vmem, size = 0x10000, scoped, tag = 'input window, operand 4, single buffered']
    #allocation11 [shape = 'u8[131072]{0}', space=vmem, size = 0x20000, scoped, tag = 'input window, operand 5, single buffered']
    #allocation12 [shape = 's32[1]{0}', space=sflag, size = 0x4, scoped, tag = 'scoped memory for tpu_custom_call.1']
    #allocation13 [shape = 'u8[131072]{0}', space=vmem, size = 0x20000, scoped, tag = 'input window, operand 6, single buffered']
    #allocation14 [shape = 'u8[65536]{0}', space=vmem, size = 0x10000, scoped, tag = 'input window, operand 7, single buffered']
    #allocation15 [shape = 's32[1]{0}', space=sflag, size = 0x4, scoped, tag = 'scoped memory for tpu_custom_call.1']
    #allocation16 [shape = 'u8[65536]{0}', space=vmem, size = 0x10000, scoped, tag = 'input window, operand 8, single buffered']
    #allocation17 [shape = 'u8[8192]{0}', space=vmem, size = 0x2000, scoped, tag = 'output window, operand 0']
    %15 = vsyncpa [#allocation3], 0
    %s16 = scalar_lea.sflag [#allocation3], 1
    %17 = vsyncpa %s16, 0
    %18 = vsyncpa [#allocation6], 0
    %s19 = scalar_lea.sflag [#allocation6], 1
    %20 = vsyncpa %s19, 0
    %21 = vsyncpa [#allocation9], 0
    %22 = vsyncpa [#allocation12], 0
    %23 = vsyncpa [#allocation15], 0
    %24 = vsyncpa [#allocation4], 0
    %s25 = scalar_lea.sflag [#allocation4], 1
    %26 = vsyncpa %s25, 0
    loop: start=0, step=1, limit=4
    $region2: #{tpu_custom_call.1} parent=1 // loop_pre_header
      _
    $region3: #{tpu_custom_call.1} parent=1 // loop_header
      %s28 = sphi 0, %s32
      %p29 = scmp.ge.s32.totalorder %s28, 4
      %s38 = sphi 0, %s40
      %s41 = sphi 0, %s38
      %s42 = sphi 0, %s41
      %s58 = sphi 0, %s42
      %s64 = sphi 0, %s66
      %s67 = sphi 0, %s64
      %s68 = sphi 0, %s67
      %s84 = sphi 0, %s68
      %s88 = sphi 0, %s88
      %s90 = sphi 0, %s88
      %s91 = sphi 0, %s90
      %s105 = sphi 0, %s91
      %s109 = sphi 0, %s109
      %s111 = sphi 0, %s109
      %s112 = sphi 0, %s111
      %s126 = sphi 0, %s112
      %s130 = sphi 0, %s130
      %s132 = sphi 0, %s130
      %s133 = sphi 0, %s132
      %s147 = sphi 0, %s133
      %s151 = sphi 0, %s151
      %s153 = sphi 0, %s151
      %s154 = sphi 0, %s153
      %s168 = sphi 0, %s154
      %s172 = sphi 0, %s172
      %s174 = sphi 0, %s172
      %s175 = sphi 0, %s174
      %s189 = sphi 0, %s175
      %s193 = sphi 0, %s193
      %s195 = sphi 0, %s193
      %s196 = sphi 0, %s195
      %s210 = sphi 0, %s196
      %s214 = sphi 0, %s214
      %s216 = sphi 0, %s214
      %s217 = sphi 0, %s216
      %s231 = sphi 0, %s217
      %s235 = sphi 0, %s235
      %s237 = sphi 0, %s235
      %s238 = sphi 0, %s237
      %s252 = sphi 0, %s238
      %s258 = sphi 0, %s260
      %s261 = sphi 0, %s258
      %s262 = sphi 0, %s261
      %s278 = sphi 0, %s262
    $region4: #{tpu_custom_call.1} parent=1 // loop_header_branch
      %31 = sbr.rel (%p29) target = $region8
    $region5: #{tpu_custom_call.1} parent=1 // loop_body
      %s33 = ssub.s32 %s28, 1
      %s34 = ssub.s32 %s28, 2
      %s35 = sadd.s32 %s28, 1
      %s36 = ssub.s32 %s28, %s35
      %p37 = scmp.eq.s32.totalorder %s36, 0
      %s39 = sadd.s32 %s38, 1
      %s40 = scalar_select %p37, %s38, %s39
      %p43 = pneg %p37
      %p44 = scmp.eq.s32.totalorder %s28, 1
      %p45 = por %p43, %p44
      %p46 = scmp.ne.s32.totalorder %s38, %s41
      %p47 = scmp.eq.s32.totalorder %s28, 0
      %p48 = por %p46, %p47
      %p49 = scmp.ne.s32.totalorder %s38, %s41
      %p50 = scmp.eq.s32.totalorder %s33, 1
      %p51 = por %p49, %p50
      %p52 = scmp.ne.s32.totalorder %s41, %s42
      %p53 = scmp.eq.s32.totalorder %s33, 0
      %p54 = por %p52, %p53
      %p55 = scmp.ne.s32.totalorder %s41, %s42
      %p56 = scmp.eq.s32.totalorder %s34, 1
      %p57 = por %p55, %p56
      %p59 = scmp.ne.s32.totalorder %s42, %s58
      %p60 = scmp.eq.s32.totalorder %s34, 0
      %p61 = por %p59, %p60
      %s62 = ssub.s32 %s28, %s35
      %p63 = scmp.eq.s32.totalorder %s62, 0
      %s65 = sadd.s32 %s64, 1
      %s66 = scalar_select %p63, %s64, %s65
      %p69 = pneg %p63
      %p70 = scmp.eq.s32.totalorder %s28, 1
      %p71 = por %p69, %p70
      %p72 = scmp.ne.s32.totalorder %s64, %s67
      %p73 = scmp.eq.s32.totalorder %s28, 0
      %p74 = por %p72, %p73
      %p75 = scmp.ne.s32.totalorder %s64, %s67
      %p76 = scmp.eq.s32.totalorder %s33, 1
      %p77 = por %p75, %p76
      %p78 = scmp.ne.s32.totalorder %s67, %s68
      %p79 = scmp.eq.s32.totalorder %s33, 0
      %p80 = por %p78, %p79
      %p81 = scmp.ne.s32.totalorder %s67, %s68
      %p82 = scmp.eq.s32.totalorder %s34, 1
      %p83 = por %p81, %p82
      %p85 = scmp.ne.s32.totalorder %s68, %s84
      %p86 = scmp.eq.s32.totalorder %s34, 0
      %p87 = por %p85, %p86
      %s89 = sadd.s32 %s88, 1
      %p92 = scmp.eq.s32.totalorder %s28, 1
      %p93 = scmp.ne.s32.totalorder %s88, %s90
      %p94 = scmp.eq.s32.totalorder %s28, 0
      %p95 = por %p93, %p94
      %p96 = scmp.ne.s32.totalorder %s88, %s90
      %p97 = scmp.eq.s32.totalorder %s33, 1
      %p98 = por %p96, %p97
      %p99 = scmp.ne.s32.totalorder %s90, %s91
      %p100 = scmp.eq.s32.totalorder %s33, 0
      %p101 = por %p99, %p100
      %p102 = scmp.ne.s32.totalorder %s90, %s91
      %p103 = scmp.eq.s32.totalorder %s34, 1
      %p104 = por %p102, %p103
      %p106 = scmp.ne.s32.totalorder %s91, %s105
      %p107 = scmp.eq.s32.totalorder %s34, 0
      %p108 = por %p106, %p107
      %s110 = sadd.s32 %s109, 1
      %p113 = scmp.eq.s32.totalorder %s28, 1
      %p114 = scmp.ne.s32.totalorder %s109, %s111
      %p115 = scmp.eq.s32.totalorder %s28, 0
      %p116 = por %p114, %p115
      %p117 = scmp.ne.s32.totalorder %s109, %s111
      %p118 = scmp.eq.s32.totalorder %s33, 1
      %p119 = por %p117, %p118
      %p120 = scmp.ne.s32.totalorder %s111, %s112
      %p121 = scmp.eq.s32.totalorder %s33, 0
      %p122 = por %p120, %p121
      %p123 = scmp.ne.s32.totalorder %s111, %s112
      %p124 = scmp.eq.s32.totalorder %s34, 1
      %p125 = por %p123, %p124
      %p127 = scmp.ne.s32.totalorder %s112, %s126
      %p128 = scmp.eq.s32.totalorder %s34, 0
      %p129 = por %p127, %p128
      %s131 = sadd.s32 %s130, 1
      %p134 = scmp.eq.s32.totalorder %s28, 1
      %p135 = scmp.ne.s32.totalorder %s130, %s132
      %p136 = scmp.eq.s32.totalorder %s28, 0
      %p137 = por %p135, %p136
      %p138 = scmp.ne.s32.totalorder %s130, %s132
      %p139 = scmp.eq.s32.totalorder %s33, 1
      %p140 = por %p138, %p139
      %p141 = scmp.ne.s32.totalorder %s132, %s133
      %p142 = scmp.eq.s32.totalorder %s33, 0
      %p143 = por %p141, %p142
      %p144 = scmp.ne.s32.totalorder %s132, %s133
      %p145 = scmp.eq.s32.totalorder %s34, 1
      %p146 = por %p144, %p145
      %p148 = scmp.ne.s32.totalorder %s133, %s147
      %p149 = scmp.eq.s32.totalorder %s34, 0
      %p150 = por %p148, %p149
      %s152 = sadd.s32 %s151, 1
      %p155 = scmp.eq.s32.totalorder %s28, 1
      %p156 = scmp.ne.s32.totalorder %s151, %s153
      %p157 = scmp.eq.s32.totalorder %s28, 0
      %p158 = por %p156, %p157
      %p159 = scmp.ne.s32.totalorder %s151, %s153
      %p160 = scmp.eq.s32.totalorder %s33, 1
      %p161 = por %p159, %p160
      %p162 = scmp.ne.s32.totalorder %s153, %s154
      %p163 = scmp.eq.s32.totalorder %s33, 0
      %p164 = por %p162, %p163
      %p165 = scmp.ne.s32.totalorder %s153, %s154
      %p166 = scmp.eq.s32.totalorder %s34, 1
      %p167 = por %p165, %p166
      %p169 = scmp.ne.s32.totalorder %s154, %s168
      %p170 = scmp.eq.s32.totalorder %s34, 0
      %p171 = por %p169, %p170
      %s173 = sadd.s32 %s172, 1
      %p176 = scmp.eq.s32.totalorder %s28, 1
      %p177 = scmp.ne.s32.totalorder %s172, %s174
      %p178 = scmp.eq.s32.totalorder %s28, 0
      %p179 = por %p177, %p178
      %p180 = scmp.ne.s32.totalorder %s172, %s174
      %p181 = scmp.eq.s32.totalorder %s33, 1
      %p182 = por %p180, %p181
      %p183 = scmp.ne.s32.totalorder %s174, %s175
      %p184 = scmp.eq.s32.totalorder %s33, 0
      %p185 = por %p183, %p184
      %p186 = scmp.ne.s32.totalorder %s174, %s175
      %p187 = scmp.eq.s32.totalorder %s34, 1
      %p188 = por %p186, %p187
      %p190 = scmp.ne.s32.totalorder %s175, %s189
      %p191 = scmp.eq.s32.totalorder %s34, 0
      %p192 = por %p190, %p191
      %s194 = sadd.s32 %s193, 1
      %p197 = scmp.eq.s32.totalorder %s28, 1
      %p198 = scmp.ne.s32.totalorder %s193, %s195
      %p199 = scmp.eq.s32.totalorder %s28, 0
      %p200 = por %p198, %p199
      %p201 = scmp.ne.s32.totalorder %s193, %s195
      %p202 = scmp.eq.s32.totalorder %s33, 1
      %p203 = por %p201, %p202
      %p204 = scmp.ne.s32.totalorder %s195, %s196
      %p205 = scmp.eq.s32.totalorder %s33, 0
      %p206 = por %p204, %p205
      %p207 = scmp.ne.s32.totalorder %s195, %s196
      %p208 = scmp.eq.s32.totalorder %s34, 1
      %p209 = por %p207, %p208
      %p211 = scmp.ne.s32.totalorder %s196, %s210
      %p212 = scmp.eq.s32.totalorder %s34, 0
      %p213 = por %p211, %p212
      %s215 = sadd.s32 %s214, 1
      %p218 = scmp.eq.s32.totalorder %s28, 1
      %p219 = scmp.ne.s32.totalorder %s214, %s216
      %p220 = scmp.eq.s32.totalorder %s28, 0
      %p221 = por %p219, %p220
      %p222 = scmp.ne.s32.totalorder %s214, %s216
      %p223 = scmp.eq.s32.totalorder %s33, 1
      %p224 = por %p222, %p223
      %p225 = scmp.ne.s32.totalorder %s216, %s217
      %p226 = scmp.eq.s32.totalorder %s33, 0
      %p227 = por %p225, %p226
      %p228 = scmp.ne.s32.totalorder %s216, %s217
      %p229 = scmp.eq.s32.totalorder %s34, 1
      %p230 = por %p228, %p229
      %p232 = scmp.ne.s32.totalorder %s217, %s231
      %p233 = scmp.eq.s32.totalorder %s34, 0
      %p234 = por %p232, %p233
      %s236 = sadd.s32 %s235, 1
      %p239 = scmp.eq.s32.totalorder %s28, 1
      %p240 = scmp.ne.s32.totalorder %s235, %s237
      %p241 = scmp.eq.s32.totalorder %s28, 0
      %p242 = por %p240, %p241
      %p243 = scmp.ne.s32.totalorder %s235, %s237
      %p244 = scmp.eq.s32.totalorder %s33, 1
      %p245 = por %p243, %p244
      %p246 = scmp.ne.s32.totalorder %s237, %s238
      %p247 = scmp.eq.s32.totalorder %s33, 0
      %p248 = por %p246, %p247
      %p249 = scmp.ne.s32.totalorder %s237, %s238
      %p250 = scmp.eq.s32.totalorder %s34, 1
      %p251 = por %p249, %p250
      %p253 = scmp.ne.s32.totalorder %s238, %s252
      %p254 = scmp.eq.s32.totalorder %s34, 0
      %p255 = por %p253, %p254
      %s256 = ssub.s32 %s28, %s35
      %p257 = scmp.eq.s32.totalorder %s256, 0
      %s259 = sadd.s32 %s258, 1
      %s260 = scalar_select %p257, %s258, %s259
      %p263 = pneg %p257
      %p264 = scmp.eq.s32.totalorder %s28, 1
      %p265 = por %p263, %p264
      %p266 = scmp.ne.s32.totalorder %s258, %s261
      %p267 = scmp.eq.s32.totalorder %s28, 0
      %p268 = por %p266, %p267
      %p269 = scmp.ne.s32.totalorder %s258, %s261
      %p270 = scmp.eq.s32.totalorder %s33, 1
      %p271 = por %p269, %p270
      %p272 = scmp.ne.s32.totalorder %s261, %s262
      %p273 = scmp.eq.s32.totalorder %s33, 0
      %p274 = por %p272, %p273
      %p275 = scmp.ne.s32.totalorder %s261, %s262
      %p276 = scmp.eq.s32.totalorder %s34, 1
      %p277 = por %p275, %p276
      %p279 = scmp.ne.s32.totalorder %s262, %s278
      %p280 = scmp.eq.s32.totalorder %s34, 0
      %p281 = por %p279, %p280
      %p282 = scmp.le.s32.totalorder 1, %s28
      %p283 = scmp.lt.s32.totalorder %s28, 3
      %p284 = pnand %p282, %p283
      %p285 = pneg %p284
      // Predicated region
      $region9: #{tpu_custom_call.1} parent=5 // pred_check
        _
      $region10: #{tpu_custom_call.1} parent=5 // pred_check_branch
        %287 = sbr.rel (%p284) target = $region12
      $region11: #{tpu_custom_call.1} parent=5 // pred_region
        %s288 = ssub.s32 %s28, 1
        // Predicated region
        $region13: #{tpu_custom_call.1} parent=11 // pred_check
          %p289 = pneg %p101
        $region14: #{tpu_custom_call.1} parent=11 // pred_check_branch
          %291 = sbr.rel (%p289) target = $region16
        $region15: #{tpu_custom_call.1} parent=11 // pred_region
          %s293 = ssub.s32 4096, 4096
          %294 = vsyncadd [#allocation6], %s293
          %s295 = sshll.u32 [#allocation7], 4
          %s296 = int_to_ptr.vmem [resolvable:$true] %s295
          %301 = dma.hbm_to_vmem [thread:$0]  %s2, 4096, %s296, [#allocation6], 256, 256, 16
        $region16: #{tpu_custom_call.1} parent=11 // pred_fallthru
          _
        // Predicated region
        $region17: #{tpu_custom_call.1} parent=11 // pred_check
          %p302 = pneg %p122
        $region18: #{tpu_custom_call.1} parent=11 // pred_check_branch
          %304 = sbr.rel (%p302) target = $region20
        $region19: #{tpu_custom_call.1} parent=11 // pred_region
          %s306 = ssub.s32 2048, 2048
          %307 = vsyncadd [#allocation9], %s306
          %s308 = sshll.u32 [#allocation8], 4
          %s309 = int_to_ptr.vmem [resolvable:$true] %s308
          %314 = dma.hbm_to_vmem [thread:$0]  %s3, 2048, %s309, [#allocation9], 128, 128, 8
        $region20: #{tpu_custom_call.1} parent=11 // pred_fallthru
          _
        // Predicated region
        $region21: #{tpu_custom_call.1} parent=11 // pred_check
          %p315 = pneg %p143
        $region22: #{tpu_custom_call.1} parent=11 // pred_check_branch
          %317 = sbr.rel (%p315) target = $region24
        $region23: #{tpu_custom_call.1} parent=11 // pred_region
          %s319 = ssub.s32 2048, 2048
          %320 = vsyncadd [#allocation9], %s319
          %s321 = sshll.u32 [#allocation10], 4
          %s322 = int_to_ptr.vmem [resolvable:$true] %s321
          %327 = dma.hbm_to_vmem [thread:$0]  %s4, 2048, %s322, [#allocation9], 128, 128, 8
        $region24: #{tpu_custom_call.1} parent=11 // pred_fallthru
          _
        // Predicated region
        $region25: #{tpu_custom_call.1} parent=11 // pred_check
          %p328 = pneg %p164
        $region26: #{tpu_custom_call.1} parent=11 // pred_check_branch
          %330 = sbr.rel (%p328) target = $region28
        $region27: #{tpu_custom_call.1} parent=11 // pred_region
          %s332 = ssub.s32 4096, 4096
          %333 = vsyncadd [#allocation12], %s332
          %s334 = sshll.u32 [#allocation11], 4
          %s335 = int_to_ptr.vmem [resolvable:$true] %s334
          %340 = dma.hbm_to_vmem [thread:$0]  %s5, 4096, %s335, [#allocation12], 256, 256, 16
        $region28: #{tpu_custom_call.1} parent=11 // pred_fallthru
          _
        // Predicated region
        $region29: #{tpu_custom_call.1} parent=11 // pred_check
          %p341 = pneg %p185
        $region30: #{tpu_custom_call.1} parent=11 // pred_check_branch
          %343 = sbr.rel (%p341) target = $region32
        $region31: #{tpu_custom_call.1} parent=11 // pred_region
          %s345 = ssub.s32 4096, 4096
          %346 = vsyncadd [#allocation12], %s345
          %s347 = sshll.u32 [#allocation13], 4
          %s348 = int_to_ptr.vmem [resolvable:$true] %s347
          %353 = dma.hbm_to_vmem [thread:$0]  %s6, 4096, %s348, [#allocation12], 128, 128, 8
        $region32: #{tpu_custom_call.1} parent=11 // pred_fallthru
          _
        // Predicated region
        $region33: #{tpu_custom_call.1} parent=11 // pred_check
          %p354 = pneg %p206
        $region34: #{tpu_custom_call.1} parent=11 // pred_check_branch
          %356 = sbr.rel (%p354) target = $region36
        $region35: #{tpu_custom_call.1} parent=11 // pred_region
          %s358 = ssub.s32 2048, 2048
          %359 = vsyncadd [#allocation15], %s358
          %s360 = sshll.u32 [#allocation14], 4
          %s361 = int_to_ptr.vmem [resolvable:$true] %s360
          %366 = dma.hbm_to_vmem [thread:$0]  %s7, 2048, %s361, [#allocation15], 128, 128, 8
        $region36: #{tpu_custom_call.1} parent=11 // pred_fallthru
          _
        // Predicated region
        $region37: #{tpu_custom_call.1} parent=11 // pred_check
          %p367 = pneg %p227
        $region38: #{tpu_custom_call.1} parent=11 // pred_check_branch
          %369 = sbr.rel (%p367) target = $region40
        $region39: #{tpu_custom_call.1} parent=11 // pred_region
          %s371 = ssub.s32 2048, 2048
          %372 = vsyncadd [#allocation15], %s371
          %s373 = sshll.u32 [#allocation16], 4
          %s374 = int_to_ptr.vmem [resolvable:$true] %s373
          %379 = dma.hbm_to_vmem [thread:$0]  %s8, 2048, %s374, [#allocation15], 128, 128, 8
        $region40: #{tpu_custom_call.1} parent=11 // pred_fallthru
          _
        // Predicated region
        $region41: #{tpu_custom_call.1} parent=11 // pred_check
          %p380 = pneg %p248
        $region42: #{tpu_custom_call.1} parent=11 // pred_check_branch
          %382 = sbr.rel (%p380) target = $region44
        $region43: #{tpu_custom_call.1} parent=11 // pred_region
          _
        $region44: #{tpu_custom_call.1} parent=11 // pred_fallthru
          _
      $region12: #{tpu_custom_call.1} parent=5 // pred_fallthru
        _
      %p383 = scmp.lt.s32.totalorder %s28, 2
      // Predicated region
      $region45: #{tpu_custom_call.1} parent=5 // pred_check
        %p384 = pneg %p383
      $region46: #{tpu_custom_call.1} parent=5 // pred_check_branch
        %386 = sbr.rel (%p384) target = $region48
      $region47: #{tpu_custom_call.1} parent=5 // pred_region
        // Predicated region
        $region49: #{tpu_custom_call.1} parent=47 // pred_check
          %p387 = pneg %p48
        $region50: #{tpu_custom_call.1} parent=47 // pred_check_branch
          %389 = sbr.rel (%p387) target = $region52
        $region51: #{tpu_custom_call.1} parent=47 // pred_region
          %s390 = sand.u32 %s38, 1
          %s391 = scalar_lea.sflag [#allocation3], %s390
          %s392 = sand.u32 %s38, 1
          %s393 = smul.addr %s392, 8
          %s394 = scalar_lea.vmem [#allocation2], %s393
          %s396 = ssub.s32 128, 128
          %397 = vsyncadd %s391, %s396
          %s398 = smul.addr %s28, 128
          %s399 = scalar_lea.hbm %s0, %s398
          %s401 = sshll.u32 %s394, 4
          %s402 = int_to_ptr.vmem [resolvable:$true] %s401
          %404 = dma.hbm_to_vmem [thread:$0]  %s399, 128, %s402, %s391
        $region52: #{tpu_custom_call.1} parent=47 // pred_fallthru
          _
        // Predicated region
        $region53: #{tpu_custom_call.1} parent=47 // pred_check
          %p405 = pneg %p74
        $region54: #{tpu_custom_call.1} parent=47 // pred_check_branch
          %407 = sbr.rel (%p405) target = $region56
        $region55: #{tpu_custom_call.1} parent=47 // pred_region
          %s408 = sand.u32 %s28, 1
          %s409 = scalar_lea.sflag [#allocation6], %s408
          %s410 = sand.u32 %s64, 1
          %s411 = smul.addr %s410, 8
          %s412 = scalar_lea.vmem [#allocation5], %s411
          %s414 = ssub.s32 128, 128
          %415 = vsyncadd %s409, %s414
          %s416 = smul.addr %s28, 128
          %s417 = scalar_lea.hbm %s1, %s416
          %s419 = sshll.u32 %s412, 4
          %s420 = int_to_ptr.vmem [resolvable:$true] %s419
          %422 = dma.hbm_to_vmem [thread:$0]  %s417, 128, %s420, %s409
        $region56: #{tpu_custom_call.1} parent=47 // pred_fallthru
          _
      $region48: #{tpu_custom_call.1} parent=5 // pred_fallthru
        _
      %p423 = scmp.le.s32.totalorder 1, %s28
      %p424 = scmp.lt.s32.totalorder %s28, 3
      %p425 = pnand %p423, %p424
      %p426 = pneg %p425
      // Predicated region
      $region57: #{tpu_custom_call.1} parent=5 // pred_check
        _
      $region58: #{tpu_custom_call.1} parent=5 // pred_check_branch
        %428 = sbr.rel (%p425) target = $region60
      $region59: #{tpu_custom_call.1} parent=5 // pred_region
        %s429 = ssub.s32 %s28, 1
        %s430 = sand.u32 %s41, 1
        %s431 = scalar_lea.sflag [#allocation3], %s430
        %s432 = sand.u32 %s41, 1
        %s433 = smul.addr %s432, 8
        %s434 = scalar_lea.vmem [#allocation2], %s433
        // Predicated region
        $region61: #{tpu_custom_call.1} parent=59 // pred_check
          %p435 = pneg %p54
        $region62: #{tpu_custom_call.1} parent=59 // pred_check_branch
          %437 = sbr.rel (%p435) target = $region64
        $region63: #{tpu_custom_call.1} parent=59 // pred_region
          %438 = dma.done %s431, 128
        $region64: #{tpu_custom_call.1} parent=59 // pred_fallthru
          _
        %s439 = sand.u32 %s33, 1
        %s440 = scalar_lea.sflag [#allocation6], %s439
        %s441 = sand.u32 %s67, 1
        %s442 = smul.addr %s441, 8
        %s443 = scalar_lea.vmem [#allocation5], %s442
        // Predicated region
        $region65: #{tpu_custom_call.1} parent=59 // pred_check
          %p444 = pneg %p80
        $region66: #{tpu_custom_call.1} parent=59 // pred_check_branch
          %446 = sbr.rel (%p444) target = $region68
        $region67: #{tpu_custom_call.1} parent=59 // pred_region
          %447 = dma.done %s440, 128
        $region68: #{tpu_custom_call.1} parent=59 // pred_fallthru
          _
        // Predicated region
        $region69: #{tpu_custom_call.1} parent=59 // pred_check
          %p448 = pneg %p101
        $region70: #{tpu_custom_call.1} parent=59 // pred_check_branch
          %450 = sbr.rel (%p448) target = $region72
        $region71: #{tpu_custom_call.1} parent=59 // pred_region
          %451 = dma.done [#allocation6], 4096
        $region72: #{tpu_custom_call.1} parent=59 // pred_fallthru
          _
        // Predicated region
        $region73: #{tpu_custom_call.1} parent=59 // pred_check
          %p452 = pneg %p122
        $region74: #{tpu_custom_call.1} parent=59 // pred_check_branch
          %454 = sbr.rel (%p452) target = $region76
        $region75: #{tpu_custom_call.1} parent=59 // pred_region
          %455 = dma.done [#allocation9], 2048
        $region76: #{tpu_custom_call.1} parent=59 // pred_fallthru
          _
        // Predicated region
        $region77: #{tpu_custom_call.1} parent=59 // pred_check
          %p456 = pneg %p143
        $region78: #{tpu_custom_call.1} parent=59 // pred_check_branch
          %458 = sbr.rel (%p456) target = $region80
        $region79: #{tpu_custom_call.1} parent=59 // pred_region
          %459 = dma.done [#allocation9], 2048
        $region80: #{tpu_custom_call.1} parent=59 // pred_fallthru
          _
        // Predicated region
        $region81: #{tpu_custom_call.1} parent=59 // pred_check
          %p460 = pneg %p164
        $region82: #{tpu_custom_call.1} parent=59 // pred_check_branch
          %462 = sbr.rel (%p460) target = $region84
        $region83: #{tpu_custom_call.1} parent=59 // pred_region
          %463 = dma.done [#allocation12], 4096
        $region84: #{tpu_custom_call.1} parent=59 // pred_fallthru
          _
        // Predicated region
        $region85: #{tpu_custom_call.1} parent=59 // pred_check
          %p464 = pneg %p185
        $region86: #{tpu_custom_call.1} parent=59 // pred_check_branch
          %466 = sbr.rel (%p464) target = $region88
        $region87: #{tpu_custom_call.1} parent=59 // pred_region
          %467 = dma.done [#allocation12], 4096
        $region88: #{tpu_custom_call.1} parent=59 // pred_fallthru
          _
        // Predicated region
        $region89: #{tpu_custom_call.1} parent=59 // pred_check
          %p468 = pneg %p206
        $region90: #{tpu_custom_call.1} parent=59 // pred_check_branch
          %470 = sbr.rel (%p468) target = $region92
        $region91: #{tpu_custom_call.1} parent=59 // pred_region
          %471 = dma.done [#allocation15], 2048
        $region92: #{tpu_custom_call.1} parent=59 // pred_fallthru
          _
        // Predicated region
        $region93: #{tpu_custom_call.1} parent=59 // pred_check
          %p472 = pneg %p227
        $region94: #{tpu_custom_call.1} parent=59 // pred_check_branch
          %474 = sbr.rel (%p472) target = $region96
        $region95: #{tpu_custom_call.1} parent=59 // pred_region
          %475 = dma.done [#allocation15], 2048
        $region96: #{tpu_custom_call.1} parent=59 // pred_fallthru
          _
        %s476 = sand.u32 %s41, 1
        %s477 = scalar_lea.sflag [#allocation3], %s476
        %s478 = sand.u32 %s41, 1
        %s479 = smul.addr %s478, 8
        %s480 = scalar_lea.vmem [#allocation2], %s479
        %p481 = pneg %p54
        %p482 = pneg %p51
        %s483 = sand.u32 %s33, 1
        %s484 = scalar_lea.sflag [#allocation6], %s483
        %s485 = sand.u32 %s67, 1
        %s486 = smul.addr %s485, 8
        %s487 = scalar_lea.vmem [#allocation5], %s486
        %p488 = pneg %p80
        %p489 = pneg %p77
        %p490 = pneg %p101
        %p491 = pneg %p98
        %p492 = pneg %p122
        %p493 = pneg %p119
        %p494 = pneg %p143
        %p495 = pneg %p140
        %p496 = pneg %p164
        %p497 = pneg %p161
        %p498 = pneg %p185
        %p499 = pneg %p182
        %p500 = pneg %p206
        %p501 = pneg %p203
        %p502 = pneg %p227
        %p503 = pneg %p224
        %p504 = pneg %p248
        %p505 = pneg %p245
        %p506 = pneg %p274
        %p507 = pneg %p271
        %s508 = sand.u32 %s261, 1
        %s509 = scalar_lea.sflag [#allocation4], %s508
        %s510 = sand.u32 %s261, 1
        %s511 = smul.addr %s510, 8
        %s512 = scalar_lea.vmem [#allocation17], %s511
        %v513 = vld [vmem:[%s9] ss:$8 sm:$0x3]
        %v514 = vld [vmem:[%s9 + $0x1] ss:$0 sm:$0xff]
        %v515 = vld [vmem:[%s9 + $0x2] ss:$0 sm:$0xff]
        %s516 = scalar_lea.vmem %s9, 3
        %v517 = vld [vmem:[%s516] ss:$8 sm:$0x3]
        %v518 = vld [vmem:[%s9 + $0x4] ss:$0 sm:$0xff]
        %v519 = vld [vmem:[%s9 + $0x5] ss:$0 sm:$0xff]
        %v520 = vld [vmem:[%s9 + $0x6] ss:$0 sm:$0xff]
        %v521 = vld [vmem:[%s9 + $0x7] ss:$0 sm:$0xff]
        %v522 = vld [vmem:[%s9 + $0x10] ss:$0 sm:$0xff]
        %v523 = vld [vmem:[%s434] sm:$0xff]
        %v524 = vld [vmem:[%s443] sm:$0xff]
        %v525 = vadd.f32 %v523, %v524
        %v526 = vld [vmem:[#allocation14] sm:$0xff]
        %v527 = vld [vmem:[#allocation14 + $0x8] sm:$0xff]
        %v528 = vld [vmem:[#allocation14 + $0x10] sm:$0xff]
        %v529 = vld [vmem:[#allocation14 + $0x18] sm:$0xff]
        %v530 = vld [vmem:[#allocation14 + $0x20] sm:$0xff]
        %v531 = vld [vmem:[#allocation14 + $0x28] sm:$0xff]
        %v532 = vld [vmem:[#allocation14 + $0x30] sm:$0xff]
        %v533 = vld [vmem:[#allocation14 + $0x38] sm:$0xff]
        %v534 = vld [vmem:[#allocation14 + $0x40] sm:$0xff]
        %v535 = vld [vmem:[#allocation14 + $0x48] sm:$0xff]
        %v536 = vld [vmem:[#allocation14 + $0x50] sm:$0xff]
        %v537 = vld [vmem:[#allocation14 + $0x58] sm:$0xff]
        %v538 = vld [vmem:[#allocation14 + $0x60] sm:$0xff]
        %v539 = vld [vmem:[#allocation14 + $0x68] sm:$0xff]
        %v540 = vld [vmem:[#allocation14 + $0x70] sm:$0xff]
        %v541 = vld [vmem:[#allocation14 + $0x78] sm:$0xff]
        %v542 = vld [vmem:[#allocation16] sm:$0xff]
        %v543 = vld [vmem:[#allocation16 + $0x8] sm:$0xff]
        %v544 = vld [vmem:[#allocation16 + $0x10] sm:$0xff]
        %v545 = vld [vmem:[#allocation16 + $0x18] sm:$0xff]
        %v546 = vld [vmem:[#allocation16 + $0x20] sm:$0xff]
        %v547 = vld [vmem:[#allocation16 + $0x28] sm:$0xff]
        %v548 = vld [vmem:[#allocation16 + $0x30] sm:$0xff]
        %v549 = vld [vmem:[#allocation16 + $0x38] sm:$0xff]
        %v550 = vld [vmem:[#allocation16 + $0x40] sm:$0xff]
        %v551 = vld [vmem:[#allocation16 + $0x48] sm:$0xff]
        %v552 = vld [vmem:[#allocation16 + $0x50] sm:$0xff]
        %v553 = vld [vmem:[#allocation16 + $0x58] sm:$0xff]
        %v554 = vld [vmem:[#allocation16 + $0x60] sm:$0xff]
        %v555 = vld [vmem:[#allocation16 + $0x68] sm:$0xff]
        %v556 = vld [vmem:[#allocation16 + $0x70] sm:$0xff]
        %v557 = vld [vmem:[#allocation16 + $0x78] sm:$0xff]
        %v558 = vld [vmem:[#allocation7] sm:$0xff]
        %v559 = vld [vmem:[#allocation7 + $0x8] sm:$0xff]
        %v560 = vld [vmem:[#allocation7 + $0x10] sm:$0xff]
        %v561 = vld [vmem:[#allocation7 + $0x18] sm:$0xff]
        %v562 = vld [vmem:[#allocation7 + $0x20] sm:$0xff]
        %v563 = vld [vmem:[#allocation7 + $0x28] sm:$0xff]
        %v564 = vld [vmem:[#allocation7 + $0x30] sm:$0xff]
        %v565 = vld [vmem:[#allocation7 + $0x38] sm:$0xff]
        %v566 = vld [vmem:[#allocation7 + $0x40] sm:$0xff]
        %v567 = vld [vmem:[#allocation7 + $0x48] sm:$0xff]
        %v568 = vld [vmem:[#allocation7 + $0x50] sm:$0xff]
        %v569 = vld [vmem:[#allocation7 + $0x58] sm:$0xff]
        %v570 = vld [vmem:[#allocation7 + $0x60] sm:$0xff]
        %v571 = vld [vmem:[#allocation7 + $0x68] sm:$0xff]
        %v572 = vld [vmem:[#allocation7 + $0x70] sm:$0xff]
        %v573 = vld [vmem:[#allocation7 + $0x78] sm:$0xff]
        %v574 = vld [vmem:[#allocation7 + $0x80] sm:$0xff]
        %v575 = vld [vmem:[#allocation7 + $0x88] sm:$0xff]
        %v576 = vld [vmem:[#allocation7 + $0x90] sm:$0xff]
        %v577 = vld [vmem:[#allocation7 + $0x98] sm:$0xff]
        %v578 = vld [vmem:[#allocation7 + $0xa0] sm:$0xff]
        %v579 = vld [vmem:[#allocation7 + $0xa8] sm:$0xff]
        %v580 = vld [vmem:[#allocation7 + $0xb0] sm:$0xff]
        %v581 = vld [vmem:[#allocation7 + $0xb8] sm:$0xff]
        %v582 = vld [vmem:[#allocation7 + $0xc0] sm:$0xff]
        %v583 = vld [vmem:[#allocation7 + $0xc8] sm:$0xff]
        %v584 = vld [vmem:[#allocation7 + $0xd0] sm:$0xff]
        %v585 = vld [vmem:[#allocation7 + $0xd8] sm:$0xff]
        %v586 = vld [vmem:[#allocation7 + $0xe0] sm:$0xff]
        %v587 = vld [vmem:[#allocation7 + $0xe8] sm:$0xff]
        %v588 = vld [vmem:[#allocation7 + $0xf0] sm:$0xff]
        %v589 = vld [vmem:[#allocation7 + $0xf8] sm:$0xff]
        %v591 = vlaneseq
        %v592 = vshrl.u32 %v591, 7
        %v593 = vsub.s32 0, %v592
        %v594 = vrot.slane %v513, %v593
        %v595 = vlaneseq
        %v596 = vshrl.u32 %v595, 7
        %v597 = vsub.s32 1, %v596
        %v598 = vrot.slane %v513, %v597
        %601 = vmatprep.subr.mxu0 %v559
        %602 = vmatpush1.msra.mxu0 %v558
        %603 = vmatprep.subr.mxu0 %v561
        %604 = vmatpush1.msra.mxu0 %v560
        %605 = vmatprep.subr.mxu0 %v563
        %606 = vmatpush1.msra.mxu0 %v562
        %607 = vmatprep.subr.mxu0 %v565
        %608 = vmatpush1.msra.mxu0 %v564
        %609 = vmatprep.subr.mxu0 %v567
        %610 = vmatpush1.msra.mxu0 %v566
        %611 = vmatprep.subr.mxu0 %v569
        %612 = vmatpush1.msra.mxu0 %v568
        %613 = vmatprep.subr.mxu0 %v571
        %614 = vmatpush1.msra.mxu0 %v570
        %615 = vmatprep.subr.mxu0 %v573
        %616 = vmatpush1.msra.mxu0 %v572
        %617 = vmatprep.subr.mxu0 %v575
        %618 = vmatpush1.msra.mxu0 %v574
        %619 = vmatprep.subr.mxu0 %v577
        %620 = vmatpush1.msra.mxu0 %v576
        %621 = vmatprep.subr.mxu0 %v579
        %622 = vmatpush1.msra.mxu0 %v578
        %623 = vmatprep.subr.mxu0 %v581
        %624 = vmatpush1.msra.mxu0 %v580
        %625 = vmatprep.subr.mxu0 %v583
        %626 = vmatpush1.msra.mxu0 %v582
        %627 = vmatprep.subr.mxu0 %v585
        %628 = vmatpush1.msra.mxu0 %v584
        %629 = vmatprep.subr.mxu0 %v587
        %630 = vmatpush1.msra.mxu0 %v586
        %631 = vmatprep.subr.mxu0 %v589
        %632 = vmatpush1.msra.mxu0 %v588
        %633 = vmatprep.subr.mxu0 0.0
        %634 = vmatpush1.msra.mxu0 0.0
        %635 = vmatprep.subr.mxu0 0.0
        %636 = vmatpush1.msra.mxu0 0.0
        %637 = vmatprep.subr.mxu0 0.0
        %638 = vmatpush1.msra.mxu0 0.0
        %639 = vmatprep.subr.mxu0 0.0
        %640 = vmatpush1.msra.mxu0 0.0
        %641 = vmatprep.subr.mxu0 0.0
        %642 = vmatpush1.msra.mxu0 0.0
        %643 = vmatprep.subr.mxu0 0.0
        %644 = vmatpush1.msra.mxu0 0.0
        %645 = vmatprep.subr.mxu0 0.0
        %646 = vmatpush1.msra.mxu0 0.0
        %647 = vmatprep.subr.mxu0 0.0
        %648 = vmatpush1.msra.mxu0 0.0
        %649 = vmatprep.subr.mxu0 0.0
        %650 = vmatpush1.msra.mxu0 0.0
        %651 = vmatprep.subr.mxu0 0.0
        %652 = vmatpush1.msra.mxu0 0.0
        %653 = vmatprep.subr.mxu0 0.0
        %654 = vmatpush1.msra.mxu0 0.0
        %655 = vmatprep.subr.mxu0 0.0
        %656 = vmatpush1.msra.mxu0 0.0
        %657 = vmatprep.subr.mxu0 0.0
        %658 = vmatpush1.msra.mxu0 0.0
        %659 = vmatprep.subr.mxu0 0.0
        %660 = vmatpush1.msra.mxu0 0.0
        %661 = vmatprep.subr.mxu0 0.0
        %662 = vmatpush1.msra.mxu0 0.0
        %663 = vmatprep.subr.mxu0 0.0
        %664 = vmatpush1.msra.mxu0 0.0
        %665 = vmatprep.mubr.f32.mxu0 0.0
        %666 = vmatmul.mubr.f32.gmra.mrb[0].mxu0 %v525
        %v667 = vpop.f32.mrb[0].mxu0
        %v668 = vadd.f32 %v594, %v667
        %v669 = vpop.f32.mrb[0].mxu0
        %v670 = vadd.f32 %v598, %v669
        %671 = vdwg.mxu0
        %v672 = vld [vmem:[#allocation8] sm:$0xff]
        %v673 = vld [vmem:[#allocation8 + $0x8] sm:$0xff]
        %v674 = vld [vmem:[#allocation8 + $0x10] sm:$0xff]
        %v675 = vld [vmem:[#allocation8 + $0x18] sm:$0xff]
        %v676 = vld [vmem:[#allocation8 + $0x20] sm:$0xff]
        %v677 = vld [vmem:[#allocation8 + $0x28] sm:$0xff]
        %v678 = vld [vmem:[#allocation8 + $0x30] sm:$0xff]
        %v679 = vld [vmem:[#allocation8 + $0x38] sm:$0xff]
        %v680 = vld [vmem:[#allocation8 + $0x40] sm:$0xff]
        %v681 = vld [vmem:[#allocation8 + $0x48] sm:$0xff]
        %v682 = vld [vmem:[#allocation8 + $0x50] sm:$0xff]
        %v683 = vld [vmem:[#allocation8 + $0x58] sm:$0xff]
        %v684 = vld [vmem:[#allocation8 + $0x60] sm:$0xff]
        %v685 = vld [vmem:[#allocation8 + $0x68] sm:$0xff]
        %v686 = vld [vmem:[#allocation8 + $0x70] sm:$0xff]
        %v687 = vld [vmem:[#allocation8 + $0x78] sm:$0xff]
        %688 = vmatprep.subr.mxu0 0.0
        %689 = vmatpush1.msra.mxu0 %v672
        %690 = vmatprep.subr.mxu0 0.0
        %691 = vmatpush1.msra.mxu0 %v673
        %692 = vmatprep.subr.mxu0 0.0
        %693 = vmatpush1.msra.mxu0 %v674
        %694 = vmatprep.subr.mxu0 0.0
        %695 = vmatpush1.msra.mxu0 %v675
        %696 = vmatprep.subr.mxu0 0.0
        %697 = vmatpush1.msra.mxu0 %v676
        %698 = vmatprep.subr.mxu0 0.0
        %699 = vmatpush1.msra.mxu0 %v677
        %700 = vmatprep.subr.mxu0 0.0
        %701 = vmatpush1.msra.mxu0 %v678
        %702 = vmatprep.subr.mxu0 0.0
        %703 = vmatpush1.msra.mxu0 %v679
        %704 = vmatprep.subr.mxu0 0.0
        %705 = vmatpush1.msra.mxu0 %v680
        %706 = vmatprep.subr.mxu0 0.0
        %707 = vmatpush1.msra.mxu0 %v681
        %708 = vmatprep.subr.mxu0 0.0
        %709 = vmatpush1.msra.mxu0 %v682
        %710 = vmatprep.subr.mxu0 0.0
        %711 = vmatpush1.msra.mxu0 %v683
        %712 = vmatprep.subr.mxu0 0.0
        %713 = vmatpush1.msra.mxu0 %v684
        %714 = vmatprep.subr.mxu0 0.0
        %715 = vmatpush1.msra.mxu0 %v685
        %716 = vmatprep.subr.mxu0 0.0
        %717 = vmatpush1.msra.mxu0 %v686
        %718 = vmatprep.subr.mxu0 0.0
        %719 = vmatpush1.msra.mxu0 %v687
        %720 = vmatprep.subr.mxu0 0.0
        %721 = vmatpush1.msra.mxu0 0.0
        %722 = vmatprep.subr.mxu0 0.0
        %723 = vmatpush1.msra.mxu0 0.0
        %724 = vmatprep.subr.mxu0 0.0
        %725 = vmatpush1.msra.mxu0 0.0
        %726 = vmatprep.subr.mxu0 0.0
        %727 = vmatpush1.msra.mxu0 0.0
        %728 = vmatprep.subr.mxu0 0.0
        %729 = vmatpush1.msra.mxu0 0.0
        %730 = vmatprep.subr.mxu0 0.0
        %731 = vmatpush1.msra.mxu0 0.0
        %732 = vmatprep.subr.mxu0 0.0
        %733 = vmatpush1.msra.mxu0 0.0
        %734 = vmatprep.subr.mxu0 0.0
        %735 = vmatpush1.msra.mxu0 0.0
        %736 = vmatprep.subr.mxu0 0.0
        %737 = vmatpush1.msra.mxu0 0.0
        %738 = vmatprep.subr.mxu0 0.0
        %739 = vmatpush1.msra.mxu0 0.0
        %740 = vmatprep.subr.mxu0 0.0
        %741 = vmatpush1.msra.mxu0 0.0
        %742 = vmatprep.subr.mxu0 0.0
        %743 = vmatpush1.msra.mxu0 0.0
        %744 = vmatprep.subr.mxu0 0.0
        %745 = vmatpush1.msra.mxu0 0.0
        %746 = vmatprep.subr.mxu0 0.0
        %747 = vmatpush1.msra.mxu0 0.0
        %748 = vmatprep.subr.mxu0 0.0
        %749 = vmatpush1.msra.mxu0 0.0
        %750 = vmatprep.subr.mxu0 0.0
        %751 = vmatpush1.msra.mxu0 0.0
        %752 = vmatprep.mubr.f32.mxu0 0.0
        %753 = vmatmul.mubr.f32.gmra.mrb[0].mxu0 %v523
        %v754 = vpop.f32.mrb[0].mxu0
        %v755 = vadd.f32 %v514, %v754
        %v756 = vpop.f32.mrb[0].mxu0
        %757 = vdwg.mxu0
        %v758 = vmul.f32 %v670, %v526
        %v759 = vmul.f32 %v670, %v527
        %v760 = vmul.f32 %v670, %v528
        %v761 = vmul.f32 %v670, %v529
        %v762 = vmul.f32 %v670, %v530
        %v763 = vmul.f32 %v670, %v531
        %v764 = vmul.f32 %v670, %v532
        %v765 = vmul.f32 %v670, %v533
        %v766 = vmul.f32 %v670, %v534
        %v767 = vmul.f32 %v670, %v535
        %v768 = vmul.f32 %v670, %v536
        %v769 = vmul.f32 %v670, %v537
        %v770 = vmul.f32 %v670, %v538
        %v771 = vmul.f32 %v670, %v539
        %v772 = vmul.f32 %v670, %v540
        %v773 = vmul.f32 %v670, %v541
        %v774 = vmul.f32 %v755, %v526
        %v775 = vmul.f32 %v755, %v527
        %v776 = vmul.f32 %v755, %v528
        %v777 = vmul.f32 %v755, %v529
        %v778 = vmul.f32 %v755, %v530
        %v779 = vmul.f32 %v755, %v531
        %v780 = vmul.f32 %v755, %v532
        %v781 = vmul.f32 %v755, %v533
        %v782 = vmul.f32 %v755, %v534
        %v783 = vmul.f32 %v755, %v535
        %v784 = vmul.f32 %v755, %v536
        %v785 = vmul.f32 %v755, %v537
        %v786 = vmul.f32 %v755, %v538
        %v787 = vmul.f32 %v755, %v539
        %v788 = vmul.f32 %v755, %v540
        %v789 = vmul.f32 %v755, %v541
        %790 = vmatprep.subr.mxu0 0.0
        %791 = vmatpush1.xpose.msra.mxu0 %v758
        %792 = vmatprep.subr.mxu0 0.0
        %793 = vmatpush1.xpose.msra.mxu0 %v759
        %794 = vmatprep.subr.mxu0 0.0
        %795 = vmatpush1.xpose.msra.mxu0 %v760
        %796 = vmatprep.subr.mxu0 0.0
        %797 = vmatpush1.xpose.msra.mxu0 %v761
        %798 = vmatprep.subr.mxu0 0.0
        %799 = vmatpush1.xpose.msra.mxu0 %v762
        %800 = vmatprep.subr.mxu0 0.0
        %801 = vmatpush1.xpose.msra.mxu0 %v763
        %802 = vmatprep.subr.mxu0 0.0
        %803 = vmatpush1.xpose.msra.mxu0 %v764
        %804 = vmatprep.subr.mxu0 0.0
        %805 = vmatpush1.xpose.msra.mxu0 %v765
        %806 = vmatprep.subr.mxu0 0.0
        %807 = vmatpush1.xpose.msra.mxu0 %v766
        %808 = vmatprep.subr.mxu0 0.0
        %809 = vmatpush1.xpose.msra.mxu0 %v767
        %810 = vmatprep.subr.mxu0 0.0
        %811 = vmatpush1.xpose.msra.mxu0 %v768
        %812 = vmatprep.subr.mxu0 0.0
        %813 = vmatpush1.xpose.msra.mxu0 %v769
        %814 = vmatprep.subr.mxu0 0.0
        %815 = vmatpush1.xpose.msra.mxu0 %v770
        %816 = vmatprep.subr.mxu0 0.0
        %817 = vmatpush1.xpose.msra.mxu0 %v771
        %818 = vmatprep.subr.mxu0 0.0
        %819 = vmatpush1.xpose.msra.mxu0 %v772
        %820 = vmatprep.subr.mxu0 0.0
        %821 = vmatpush1.xpose.msra.mxu0 %v773
        %822 = vmatprep.subr.mxu0 0.0
        %823 = vmatpush1.xpose.msra.mxu0 0.0
        %824 = vmatprep.subr.mxu0 0.0
        %825 = vmatpush1.xpose.msra.mxu0 0.0
        %826 = vmatprep.subr.mxu0 0.0
        %827 = vmatpush1.xpose.msra.mxu0 0.0
        %828 = vmatprep.subr.mxu0 0.0
        %829 = vmatpush1.xpose.msra.mxu0 0.0
        %830 = vmatprep.subr.mxu0 0.0
        %831 = vmatpush1.xpose.msra.mxu0 0.0
        %832 = vmatprep.subr.mxu0 0.0
        %833 = vmatpush1.xpose.msra.mxu0 0.0
        %834 = vmatprep.subr.mxu0 0.0
        %835 = vmatpush1.xpose.msra.mxu0 0.0
        %836 = vmatprep.subr.mxu0 0.0
        %837 = vmatpush1.xpose.msra.mxu0 0.0
        %838 = vmatprep.subr.mxu0 0.0
        %839 = vmatpush1.xpose.msra.mxu0 0.0
        %840 = vmatprep.subr.mxu0 0.0
        %841 = vmatpush1.xpose.msra.mxu0 0.0
        %842 = vmatprep.subr.mxu0 0.0
        %843 = vmatpush1.xpose.msra.mxu0 0.0
        %844 = vmatprep.subr.mxu0 0.0
        %845 = vmatpush1.xpose.msra.mxu0 0.0
        %846 = vmatprep.subr.mxu0 0.0
        %847 = vmatpush1.xpose.msra.mxu0 0.0
        %848 = vmatprep.subr.mxu0 0.0
        %849 = vmatpush1.xpose.msra.mxu0 0.0
        %850 = vmatprep.subr.mxu0 0.0
        %851 = vmatpush1.xpose.msra.mxu0 0.0
        %852 = vmatprep.subr.mxu0 0.0
        %853 = vmatpush1.xpose.msra.mxu0 0.0
        %854 = vmatprep.mubr.f32.mxu0 0.0
        %855 = vmatmul.mubr.f32.gmra.mrb[0].mxu0 %v668
        %v856 = vpop.f32.mrb[0].mxu0
        %v857 = vadd.f32 0.0, %v856
        %v858 = vpop.f32.mrb[0].mxu0
        %859 = vdwg.mxu0
        %860 = vmax.xlane.f32.xlu0 %v857
        %v861 = vpop.xlane.xlu0 %860
        %v862 = vsub.f32 %v857, %v861
        %v863 = vmul.f32 %v862, 1.442695
        %v864 = vpow.pop %v863
        %865 = vmatprep.subr.mxu0 0.0
        %866 = vmatpush1.msra.mxu0 %v526
        %867 = vmatprep.subr.mxu0 0.0
        %868 = vmatpush1.msra.mxu0 %v527
        %869 = vmatprep.subr.mxu0 0.0
        %870 = vmatpush1.msra.mxu0 %v528
        %871 = vmatprep.subr.mxu0 0.0
        %872 = vmatpush1.msra.mxu0 %v529
        %873 = vmatprep.subr.mxu0 0.0
        %874 = vmatpush1.msra.mxu0 %v530
        %875 = vmatprep.subr.mxu0 0.0
        %876 = vmatpush1.msra.mxu0 %v531
        %877 = vmatprep.subr.mxu0 0.0
        %878 = vmatpush1.msra.mxu0 %v532
        %879 = vmatprep.subr.mxu0 0.0
        %880 = vmatpush1.msra.mxu0 %v533
        %881 = vmatprep.subr.mxu0 0.0
        %882 = vmatpush1.msra.mxu0 %v534
        %883 = vmatprep.subr.mxu0 0.0
        %884 = vmatpush1.msra.mxu0 %v535
        %885 = vmatprep.subr.mxu0 0.0
        %886 = vmatpush1.msra.mxu0 %v536
        %887 = vmatprep.subr.mxu0 0.0
        %888 = vmatpush1.msra.mxu0 %v537
        %889 = vmatprep.subr.mxu0 0.0
        %890 = vmatpush1.msra.mxu0 %v538
        %891 = vmatprep.subr.mxu0 0.0
        %892 = vmatpush1.msra.mxu0 %v539
        %893 = vmatprep.subr.mxu0 0.0
        %894 = vmatpush1.msra.mxu0 %v540
        %895 = vmatprep.subr.mxu0 0.0
        %896 = vmatpush1.msra.mxu0 %v541
        %897 = vmatprep.subr.mxu0 0.0
        %898 = vmatpush1.msra.mxu0 0.0
        %899 = vmatprep.subr.mxu0 0.0
        %900 = vmatpush1.msra.mxu0 0.0
        %901 = vmatprep.subr.mxu0 0.0
        %902 = vmatpush1.msra.mxu0 0.0
        %903 = vmatprep.subr.mxu0 0.0
        %904 = vmatpush1.msra.mxu0 0.0
        %905 = vmatprep.subr.mxu0 0.0
        %906 = vmatpush1.msra.mxu0 0.0
        %907 = vmatprep.subr.mxu0 0.0
        %908 = vmatpush1.msra.mxu0 0.0
        %909 = vmatprep.subr.mxu0 0.0
        %910 = vmatpush1.msra.mxu0 0.0
        %911 = vmatprep.subr.mxu0 0.0
        %912 = vmatpush1.msra.mxu0 0.0
        %913 = vmatprep.subr.mxu0 0.0
        %914 = vmatpush1.msra.mxu0 0.0
        %915 = vmatprep.subr.mxu0 0.0
        %916 = vmatpush1.msra.mxu0 0.0
        %917 = vmatprep.subr.mxu0 0.0
        %918 = vmatpush1.msra.mxu0 0.0
        %919 = vmatprep.subr.mxu0 0.0
        %920 = vmatpush1.msra.mxu0 0.0
        %921 = vmatprep.subr.mxu0 0.0
        %922 = vmatpush1.msra.mxu0 0.0
        %923 = vmatprep.subr.mxu0 0.0
        %924 = vmatpush1.msra.mxu0 0.0
        %925 = vmatprep.subr.mxu0 0.0
        %926 = vmatpush1.msra.mxu0 0.0
        %927 = vmatprep.subr.mxu0 0.0
        %928 = vmatpush1.msra.mxu0 0.0
        %929 = vmatprep.mubr.f32.mxu0 0.0
        %930 = vmatmul.mubr.f32.gmra.mrb[0].mxu0 %v864
        %v931 = vpop.f32.mrb[0].mxu0
        %v932 = vadd.f32 0.0, %v931
        %v933 = vpop.f32.mrb[0].mxu0
        %934 = vdwg.mxu0
        %v935 = vrcp.pop %v932
        %v936 = vmul.f32 %v864, %v935
        %937 = vmatprep.subr.mxu0 0.0
        %938 = vmatpush1.msra.mxu0 %v774
        %939 = vmatprep.subr.mxu0 0.0
        %940 = vmatpush1.msra.mxu0 %v775
        %941 = vmatprep.subr.mxu0 0.0
        %942 = vmatpush1.msra.mxu0 %v776
        %943 = vmatprep.subr.mxu0 0.0
        %944 = vmatpush1.msra.mxu0 %v777
        %945 = vmatprep.subr.mxu0 0.0
        %946 = vmatpush1.msra.mxu0 %v778
        %947 = vmatprep.subr.mxu0 0.0
        %948 = vmatpush1.msra.mxu0 %v779
        %949 = vmatprep.subr.mxu0 0.0
        %950 = vmatpush1.msra.mxu0 %v780
        %951 = vmatprep.subr.mxu0 0.0
        %952 = vmatpush1.msra.mxu0 %v781
        %953 = vmatprep.subr.mxu0 0.0
        %954 = vmatpush1.msra.mxu0 %v782
        %955 = vmatprep.subr.mxu0 0.0
        %956 = vmatpush1.msra.mxu0 %v783
        %957 = vmatprep.subr.mxu0 0.0
        %958 = vmatpush1.msra.mxu0 %v784
        %959 = vmatprep.subr.mxu0 0.0
        %960 = vmatpush1.msra.mxu0 %v785
        %961 = vmatprep.subr.mxu0 0.0
        %962 = vmatpush1.msra.mxu0 %v786
        %963 = vmatprep.subr.mxu0 0.0
        %964 = vmatpush1.msra.mxu0 %v787
        %965 = vmatprep.subr.mxu0 0.0
        %966 = vmatpush1.msra.mxu0 %v788
        %967 = vmatprep.subr.mxu0 0.0
        %968 = vmatpush1.msra.mxu0 %v789
        %969 = vmatprep.subr.mxu0 0.0
        %970 = vmatpush1.msra.mxu0 0.0
        %971 = vmatprep.subr.mxu0 0.0
        %972 = vmatpush1.msra.mxu0 0.0
        %973 = vmatprep.subr.mxu0 0.0
        %974 = vmatpush1.msra.mxu0 0.0
        %975 = vmatprep.subr.mxu0 0.0
        %976 = vmatpush1.msra.mxu0 0.0
        %977 = vmatprep.subr.mxu0 0.0
        %978 = vmatpush1.msra.mxu0 0.0
        %979 = vmatprep.subr.mxu0 0.0
        %980 = vmatpush1.msra.mxu0 0.0
        %981 = vmatprep.subr.mxu0 0.0
        %982 = vmatpush1.msra.mxu0 0.0
        %983 = vmatprep.subr.mxu0 0.0
        %984 = vmatpush1.msra.mxu0 0.0
        %985 = vmatprep.subr.mxu0 0.0
        %986 = vmatpush1.msra.mxu0 0.0
        %987 = vmatprep.subr.mxu0 0.0
        %988 = vmatpush1.msra.mxu0 0.0
        %989 = vmatprep.subr.mxu0 0.0
        %990 = vmatpush1.msra.mxu0 0.0
        %991 = vmatprep.subr.mxu0 0.0
        %992 = vmatpush1.msra.mxu0 0.0
        %993 = vmatprep.subr.mxu0 0.0
        %994 = vmatpush1.msra.mxu0 0.0
        %995 = vmatprep.subr.mxu0 0.0
        %996 = vmatpush1.msra.mxu0 0.0
        %997 = vmatprep.subr.mxu0 0.0
        %998 = vmatpush1.msra.mxu0 0.0
        %999 = vmatprep.subr.mxu0 0.0
        %1000 = vmatpush1.msra.mxu0 0.0
        %1001 = vmatprep.mubr.f32.mxu0 0.0
        %1002 = vmatmul.mubr.f32.gmra.mrb[0].mxu0 %v936
        %v1003 = vpop.f32.mrb[0].mxu0
        %v1004 = vadd.f32 0.0, %v1003
        %v1005 = vpop.f32.mrb[0].mxu0
        %1006 = vdwg.mxu0
        %v1007 = vld [vmem:[#allocation10] sm:$0xff]
        %v1008 = vld [vmem:[#allocation10 + $0x8] sm:$0xff]
        %v1009 = vld [vmem:[#allocation10 + $0x10] sm:$0xff]
        %v1010 = vld [vmem:[#allocation10 + $0x18] sm:$0xff]
        %v1011 = vld [vmem:[#allocation10 + $0x20] sm:$0xff]
        %v1012 = vld [vmem:[#allocation10 + $0x28] sm:$0xff]
        %v1013 = vld [vmem:[#allocation10 + $0x30] sm:$0xff]
        %v1014 = vld [vmem:[#allocation10 + $0x38] sm:$0xff]
        %v1015 = vld [vmem:[#allocation10 + $0x40] sm:$0xff]
        %v1016 = vld [vmem:[#allocation10 + $0x48] sm:$0xff]
        %v1017 = vld [vmem:[#allocation10 + $0x50] sm:$0xff]
        %v1018 = vld [vmem:[#allocation10 + $0x58] sm:$0xff]
        %v1019 = vld [vmem:[#allocation10 + $0x60] sm:$0xff]
        %v1020 = vld [vmem:[#allocation10 + $0x68] sm:$0xff]
        %v1021 = vld [vmem:[#allocation10 + $0x70] sm:$0xff]
        %v1022 = vld [vmem:[#allocation10 + $0x78] sm:$0xff]
        %1023 = vmatprep.subr.mxu0 0.0
        %1024 = vmatpush1.msra.mxu0 %v1007
        %1025 = vmatprep.subr.mxu0 0.0
        %1026 = vmatpush1.msra.mxu0 %v1008
        %1027 = vmatprep.subr.mxu0 0.0
        %1028 = vmatpush1.msra.mxu0 %v1009
        %1029 = vmatprep.subr.mxu0 0.0
        %1030 = vmatpush1.msra.mxu0 %v1010
        %1031 = vmatprep.subr.mxu0 0.0
        %1032 = vmatpush1.msra.mxu0 %v1011
        %1033 = vmatprep.subr.mxu0 0.0
        %1034 = vmatpush1.msra.mxu0 %v1012
        %1035 = vmatprep.subr.mxu0 0.0
        %1036 = vmatpush1.msra.mxu0 %v1013
        %1037 = vmatprep.subr.mxu0 0.0
        %1038 = vmatpush1.msra.mxu0 %v1014
        %1039 = vmatprep.subr.mxu0 0.0
        %1040 = vmatpush1.msra.mxu0 %v1015
        %1041 = vmatprep.subr.mxu0 0.0
        %1042 = vmatpush1.msra.mxu0 %v1016
        %1043 = vmatprep.subr.mxu0 0.0
        %1044 = vmatpush1.msra.mxu0 %v1017
        %1045 = vmatprep.subr.mxu0 0.0
        %1046 = vmatpush1.msra.mxu0 %v1018
        %1047 = vmatprep.subr.mxu0 0.0
        %1048 = vmatpush1.msra.mxu0 %v1019
        %1049 = vmatprep.subr.mxu0 0.0
        %1050 = vmatpush1.msra.mxu0 %v1020
        %1051 = vmatprep.subr.mxu0 0.0
        %1052 = vmatpush1.msra.mxu0 %v1021
        %1053 = vmatprep.subr.mxu0 0.0
        %1054 = vmatpush1.msra.mxu0 %v1022
        %1055 = vmatprep.subr.mxu0 0.0
        %1056 = vmatpush1.msra.mxu0 0.0
        %1057 = vmatprep.subr.mxu0 0.0
        %1058 = vmatpush1.msra.mxu0 0.0
        %1059 = vmatprep.subr.mxu0 0.0
        %1060 = vmatpush1.msra.mxu0 0.0
        %1061 = vmatprep.subr.mxu0 0.0
        %1062 = vmatpush1.msra.mxu0 0.0
        %1063 = vmatprep.subr.mxu0 0.0
        %1064 = vmatpush1.msra.mxu0 0.0
        %1065 = vmatprep.subr.mxu0 0.0
        %1066 = vmatpush1.msra.mxu0 0.0
        %1067 = vmatprep.subr.mxu0 0.0
        %1068 = vmatpush1.msra.mxu0 0.0
        %1069 = vmatprep.subr.mxu0 0.0
        %1070 = vmatpush1.msra.mxu0 0.0
        %1071 = vmatprep.subr.mxu0 0.0
        %1072 = vmatpush1.msra.mxu0 0.0
        %1073 = vmatprep.subr.mxu0 0.0
        %1074 = vmatpush1.msra.mxu0 0.0
        %1075 = vmatprep.subr.mxu0 0.0
        %1076 = vmatpush1.msra.mxu0 0.0
        %1077 = vmatprep.subr.mxu0 0.0
        %1078 = vmatpush1.msra.mxu0 0.0
        %1079 = vmatprep.subr.mxu0 0.0
        %1080 = vmatpush1.msra.mxu0 0.0
        %1081 = vmatprep.subr.mxu0 0.0
        %1082 = vmatpush1.msra.mxu0 0.0
        %1083 = vmatprep.subr.mxu0 0.0
        %1084 = vmatpush1.msra.mxu0 0.0
        %1085 = vmatprep.subr.mxu0 0.0
        %1086 = vmatpush1.msra.mxu0 0.0
        %1087 = vmatprep.mubr.f32.mxu0 0.0
        %1088 = vmatmul.mubr.f32.gmra.mrb[0].mxu0 %v1004
        %v1089 = vpop.f32.mrb[0].mxu0
        %v1090 = vadd.f32 %v515, %v1089
        %v1091 = vpop.f32.mrb[0].mxu0
        %1092 = vdwg.mxu0
        %v1093 = vadd.f32 %v523, %v1090
        %1094 = vmatprep.subr.mxu0 0.0
        %1095 = vmatpush1.msra.mxu0 %v542
        %1096 = vmatprep.subr.mxu0 0.0
        %1097 = vmatpush1.msra.mxu0 %v543
        %1098 = vmatprep.subr.mxu0 0.0
        %1099 = vmatpush1.msra.mxu0 %v544
        %1100 = vmatprep.subr.mxu0 0.0
        %1101 = vmatpush1.msra.mxu0 %v545
        %1102 = vmatprep.subr.mxu0 0.0
        %1103 = vmatpush1.msra.mxu0 %v546
        %1104 = vmatprep.subr.mxu0 0.0
        %1105 = vmatpush1.msra.mxu0 %v547
        %1106 = vmatprep.subr.mxu0 0.0
        %1107 = vmatpush1.msra.mxu0 %v548
        %1108 = vmatprep.subr.mxu0 0.0
        %1109 = vmatpush1.msra.mxu0 %v549
        %1110 = vmatprep.subr.mxu0 0.0
        %1111 = vmatpush1.msra.mxu0 %v550
        %1112 = vmatprep.subr.mxu0 0.0
        %1113 = vmatpush1.msra.mxu0 %v551
        %1114 = vmatprep.subr.mxu0 0.0
        %1115 = vmatpush1.msra.mxu0 %v552
        %1116 = vmatprep.subr.mxu0 0.0
        %1117 = vmatpush1.msra.mxu0 %v553
        %1118 = vmatprep.subr.mxu0 0.0
        %1119 = vmatpush1.msra.mxu0 %v554
        %1120 = vmatprep.subr.mxu0 0.0
        %1121 = vmatpush1.msra.mxu0 %v555
        %1122 = vmatprep.subr.mxu0 0.0
        %1123 = vmatpush1.msra.mxu0 %v556
        %1124 = vmatprep.subr.mxu0 0.0
        %1125 = vmatpush1.msra.mxu0 %v557
        %1126 = vmatprep.subr.mxu0 0.0
        %1127 = vmatpush1.msra.mxu0 0.0
        %1128 = vmatprep.subr.mxu0 0.0
        %1129 = vmatpush1.msra.mxu0 0.0
        %1130 = vmatprep.subr.mxu0 0.0
        %1131 = vmatpush1.msra.mxu0 0.0
        %1132 = vmatprep.subr.mxu0 0.0
        %1133 = vmatpush1.msra.mxu0 0.0
        %1134 = vmatprep.subr.mxu0 0.0
        %1135 = vmatpush1.msra.mxu0 0.0
        %1136 = vmatprep.subr.mxu0 0.0
        %1137 = vmatpush1.msra.mxu0 0.0
        %1138 = vmatprep.subr.mxu0 0.0
        %1139 = vmatpush1.msra.mxu0 0.0
        %1140 = vmatprep.subr.mxu0 0.0
        %1141 = vmatpush1.msra.mxu0 0.0
        %1142 = vmatprep.subr.mxu0 0.0
        %1143 = vmatpush1.msra.mxu0 0.0
        %1144 = vmatprep.subr.mxu0 0.0
        %1145 = vmatpush1.msra.mxu0 0.0
        %1146 = vmatprep.subr.mxu0 0.0
        %1147 = vmatpush1.msra.mxu0 0.0
        %1148 = vmatprep.subr.mxu0 0.0
        %1149 = vmatpush1.msra.mxu0 0.0
        %1150 = vmatprep.subr.mxu0 0.0
        %1151 = vmatpush1.msra.mxu0 0.0
        %1152 = vmatprep.subr.mxu0 0.0
        %1153 = vmatpush1.msra.mxu0 0.0
        %1154 = vmatprep.subr.mxu0 0.0
        %1155 = vmatpush1.msra.mxu0 0.0
        %1156 = vmatprep.subr.mxu0 0.0
        %1157 = vmatpush1.msra.mxu0 0.0
        %1158 = vmatprep.mubr.f32.mxu0 0.0
        %1159 = vmatmul.mubr.f32.gmra.mrb[0].mxu0 %v1093
        %v1160 = vpop.f32.mrb[0].mxu0
        %v1161 = vadd.f32 0.0, %v1160
        %v1162 = vpop.f32.mrb[0].mxu0
        %1163 = vdwg.mxu0
        %v1164 = vsub.f32 %v1093, %v1161
        %v1165 = vmul.f32 %v1164, %v1164
        %1166 = vmatprep.subr.mxu0 0.0
        %1167 = vmatpush1.msra.mxu0 %v542
        %1168 = vmatprep.subr.mxu0 0.0
        %1169 = vmatpush1.msra.mxu0 %v543
        %1170 = vmatprep.subr.mxu0 0.0
        %1171 = vmatpush1.msra.mxu0 %v544
        %1172 = vmatprep.subr.mxu0 0.0
        %1173 = vmatpush1.msra.mxu0 %v545
        %1174 = vmatprep.subr.mxu0 0.0
        %1175 = vmatpush1.msra.mxu0 %v546
        %1176 = vmatprep.subr.mxu0 0.0
        %1177 = vmatpush1.msra.mxu0 %v547
        %1178 = vmatprep.subr.mxu0 0.0
        %1179 = vmatpush1.msra.mxu0 %v548
        %1180 = vmatprep.subr.mxu0 0.0
        %1181 = vmatpush1.msra.mxu0 %v549
        %1182 = vmatprep.subr.mxu0 0.0
        %1183 = vmatpush1.msra.mxu0 %v550
        %1184 = vmatprep.subr.mxu0 0.0
        %1185 = vmatpush1.msra.mxu0 %v551
        %1186 = vmatprep.subr.mxu0 0.0
        %1187 = vmatpush1.msra.mxu0 %v552
        %1188 = vmatprep.subr.mxu0 0.0
        %1189 = vmatpush1.msra.mxu0 %v553
        %1190 = vmatprep.subr.mxu0 0.0
        %1191 = vmatpush1.msra.mxu0 %v554
        %1192 = vmatprep.subr.mxu0 0.0
        %1193 = vmatpush1.msra.mxu0 %v555
        %1194 = vmatprep.subr.mxu0 0.0
        %1195 = vmatpush1.msra.mxu0 %v556
        %1196 = vmatprep.subr.mxu0 0.0
        %1197 = vmatpush1.msra.mxu0 %v557
        %1198 = vmatprep.subr.mxu0 0.0
        %1199 = vmatpush1.msra.mxu0 0.0
        %1200 = vmatprep.subr.mxu0 0.0
        %1201 = vmatpush1.msra.mxu0 0.0
        %1202 = vmatprep.subr.mxu0 0.0
        %1203 = vmatpush1.msra.mxu0 0.0
        %1204 = vmatprep.subr.mxu0 0.0
        %1205 = vmatpush1.msra.mxu0 0.0
        %1206 = vmatprep.subr.mxu0 0.0
        %1207 = vmatpush1.msra.mxu0 0.0
        %1208 = vmatprep.subr.mxu0 0.0
        %1209 = vmatpush1.msra.mxu0 0.0
        %1210 = vmatprep.subr.mxu0 0.0
        %1211 = vmatpush1.msra.mxu0 0.0
        %1212 = vmatprep.subr.mxu0 0.0
        %1213 = vmatpush1.msra.mxu0 0.0
        %1214 = vmatprep.subr.mxu0 0.0
        %1215 = vmatpush1.msra.mxu0 0.0
        %1216 = vmatprep.subr.mxu0 0.0
        %1217 = vmatpush1.msra.mxu0 0.0
        %1218 = vmatprep.subr.mxu0 0.0
        %1219 = vmatpush1.msra.mxu0 0.0
        %1220 = vmatprep.subr.mxu0 0.0
        %1221 = vmatpush1.msra.mxu0 0.0
        %1222 = vmatprep.subr.mxu0 0.0
        %1223 = vmatpush1.msra.mxu0 0.0
        %1224 = vmatprep.subr.mxu0 0.0
        %1225 = vmatpush1.msra.mxu0 0.0
        %1226 = vmatprep.subr.mxu0 0.0
        %1227 = vmatpush1.msra.mxu0 0.0
        %1228 = vmatprep.subr.mxu0 0.0
        %1229 = vmatpush1.msra.mxu0 0.0
        %1230 = vmatprep.mubr.f32.mxu0 0.0
        %1231 = vmatmul.mubr.f32.gmra.mrb[0].mxu0 %v1165
        %v1232 = vpop.f32.mrb[0].mxu0
        %v1233 = vadd.f32 1e-05, %v1232
        %v1234 = vpop.f32.mrb[0].mxu0
        %1235 = vdwg.mxu0
        %v1236 = vrsqrt.pop %v1233
        %v1237 = vmul.f32 %v1164, %v1236
        %v1238 = vmul.f32 %v1237, %v519
        %v1239 = vadd.f32 %v1238, %v520
        %v1240 = vld [vmem:[#allocation11] sm:$0xff]
        %v1241 = vld [vmem:[#allocation11 + $0x8] sm:$0xff]
        %v1242 = vld [vmem:[#allocation11 + $0x10] sm:$0xff]
        %v1243 = vld [vmem:[#allocation11 + $0x18] sm:$0xff]
        %v1244 = vld [vmem:[#allocation11 + $0x20] sm:$0xff]
        %v1245 = vld [vmem:[#allocation11 + $0x28] sm:$0xff]
        %v1246 = vld [vmem:[#allocation11 + $0x30] sm:$0xff]
        %v1247 = vld [vmem:[#allocation11 + $0x38] sm:$0xff]
        %v1248 = vld [vmem:[#allocation11 + $0x40] sm:$0xff]
        %v1249 = vld [vmem:[#allocation11 + $0x48] sm:$0xff]
        %v1250 = vld [vmem:[#allocation11 + $0x50] sm:$0xff]
        %v1251 = vld [vmem:[#allocation11 + $0x58] sm:$0xff]
        %v1252 = vld [vmem:[#allocation11 + $0x60] sm:$0xff]
        %v1253 = vld [vmem:[#allocation11 + $0x68] sm:$0xff]
        %v1254 = vld [vmem:[#allocation11 + $0x70] sm:$0xff]
        %v1255 = vld [vmem:[#allocation11 + $0x78] sm:$0xff]
        %v1256 = vld [vmem:[#allocation11 + $0x80] sm:$0xff]
        %v1257 = vld [vmem:[#allocation11 + $0x88] sm:$0xff]
        %v1258 = vld [vmem:[#allocation11 + $0x90] sm:$0xff]
        %v1259 = vld [vmem:[#allocation11 + $0x98] sm:$0xff]
        %v1260 = vld [vmem:[#allocation11 + $0xa0] sm:$0xff]
        %v1261 = vld [vmem:[#allocation11 + $0xa8] sm:$0xff]
        %v1262 = vld [vmem:[#allocation11 + $0xb0] sm:$0xff]
        %v1263 = vld [vmem:[#allocation11 + $0xb8] sm:$0xff]
        %v1264 = vld [vmem:[#allocation11 + $0xc0] sm:$0xff]
        %v1265 = vld [vmem:[#allocation11 + $0xc8] sm:$0xff]
        %v1266 = vld [vmem:[#allocation11 + $0xd0] sm:$0xff]
        %v1267 = vld [vmem:[#allocation11 + $0xd8] sm:$0xff]
        %v1268 = vld [vmem:[#allocation11 + $0xe0] sm:$0xff]
        %v1269 = vld [vmem:[#allocation11 + $0xe8] sm:$0xff]
        %v1270 = vld [vmem:[#allocation11 + $0xf0] sm:$0xff]
        %v1271 = vld [vmem:[#allocation11 + $0xf8] sm:$0xff]
        %v1273 = vlaneseq
        %v1274 = vshrl.u32 %v1273, 7
        %v1275 = vsub.s32 0, %v1274
        %v1276 = vrot.slane %v517, %v1275
        %v1277 = vlaneseq
        %v1278 = vshrl.u32 %v1277, 7
        %v1279 = vsub.s32 1, %v1278
        %v1280 = vrot.slane %v517, %v1279
        %1283 = vmatprep.subr.mxu0 %v1241
        %1284 = vmatpush1.msra.mxu0 %v1240
        %1285 = vmatprep.subr.mxu0 %v1243
        %1286 = vmatpush1.msra.mxu0 %v1242
        %1287 = vmatprep.subr.mxu0 %v1245
        %1288 = vmatpush1.msra.mxu0 %v1244
        %1289 = vmatprep.subr.mxu0 %v1247
        %1290 = vmatpush1.msra.mxu0 %v1246
        %1291 = vmatprep.subr.mxu0 %v1249
        %1292 = vmatpush1.msra.mxu0 %v1248
        %1293 = vmatprep.subr.mxu0 %v1251
        %1294 = vmatpush1.msra.mxu0 %v1250
        %1295 = vmatprep.subr.mxu0 %v1253
        %1296 = vmatpush1.msra.mxu0 %v1252
        %1297 = vmatprep.subr.mxu0 %v1255
        %1298 = vmatpush1.msra.mxu0 %v1254
        %1299 = vmatprep.subr.mxu0 %v1257
        %1300 = vmatpush1.msra.mxu0 %v1256
        %1301 = vmatprep.subr.mxu0 %v1259
        %1302 = vmatpush1.msra.mxu0 %v1258
        %1303 = vmatprep.subr.mxu0 %v1261
        %1304 = vmatpush1.msra.mxu0 %v1260
        %1305 = vmatprep.subr.mxu0 %v1263
        %1306 = vmatpush1.msra.mxu0 %v1262
        %1307 = vmatprep.subr.mxu0 %v1265
        %1308 = vmatpush1.msra.mxu0 %v1264
        %1309 = vmatprep.subr.mxu0 %v1267
        %1310 = vmatpush1.msra.mxu0 %v1266
        %1311 = vmatprep.subr.mxu0 %v1269
        %1312 = vmatpush1.msra.mxu0 %v1268
        %1313 = vmatprep.subr.mxu0 %v1271
        %1314 = vmatpush1.msra.mxu0 %v1270
        %1315 = vmatprep.subr.mxu0 0.0
        %1316 = vmatpush1.msra.mxu0 0.0
        %1317 = vmatprep.subr.mxu0 0.0
        %1318 = vmatpush1.msra.mxu0 0.0
        %1319 = vmatprep.subr.mxu0 0.0
        %1320 = vmatpush1.msra.mxu0 0.0
        %1321 = vmatprep.subr.mxu0 0.0
        %1322 = vmatpush1.msra.mxu0 0.0
        %1323 = vmatprep.subr.mxu0 0.0
        %1324 = vmatpush1.msra.mxu0 0.0
        %1325 = vmatprep.subr.mxu0 0.0
        %1326 = vmatpush1.msra.mxu0 0.0
        %1327 = vmatprep.subr.mxu0 0.0
        %1328 = vmatpush1.msra.mxu0 0.0
        %1329 = vmatprep.subr.mxu0 0.0
        %1330 = vmatpush1.msra.mxu0 0.0
        %1331 = vmatprep.subr.mxu0 0.0
        %1332 = vmatpush1.msra.mxu0 0.0
        %1333 = vmatprep.subr.mxu0 0.0
        %1334 = vmatpush1.msra.mxu0 0.0
        %1335 = vmatprep.subr.mxu0 0.0
        %1336 = vmatpush1.msra.mxu0 0.0
        %1337 = vmatprep.subr.mxu0 0.0
        %1338 = vmatpush1.msra.mxu0 0.0
        %1339 = vmatprep.subr.mxu0 0.0
        %1340 = vmatpush1.msra.mxu0 0.0
        %1341 = vmatprep.subr.mxu0 0.0
        %1342 = vmatpush1.msra.mxu0 0.0
        %1343 = vmatprep.subr.mxu0 0.0
        %1344 = vmatpush1.msra.mxu0 0.0
        %1345 = vmatprep.subr.mxu0 0.0
        %1346 = vmatpush1.msra.mxu0 0.0
        %1347 = vmatprep.mubr.f32.mxu0 0.0
        %1348 = vmatmul.mubr.f32.gmra.mrb[0].mxu0 %v1239
        %v1349 = vpop.f32.mrb[0].mxu0
        %v1350 = vadd.f32 %v1276, %v1349
        %v1351 = vpop.f32.mrb[0].mxu0
        %v1352 = vadd.f32 %v1280, %v1351
        %1353 = vdwg.mxu0
        %v1354 = vmax.f32 %v1350, 0.0
        %v1355 = vmax.f32 %v1352, 0.0
        %v1356 = vld [vmem:[#allocation13] sm:$0xff]
        %v1357 = vld [vmem:[#allocation13 + $0x8] sm:$0xff]
        %v1358 = vld [vmem:[#allocation13 + $0x10] sm:$0xff]
        %v1359 = vld [vmem:[#allocation13 + $0x18] sm:$0xff]
        %v1360 = vld [vmem:[#allocation13 + $0x20] sm:$0xff]
        %v1361 = vld [vmem:[#allocation13 + $0x28] sm:$0xff]
        %v1362 = vld [vmem:[#allocation13 + $0x30] sm:$0xff]
        %v1363 = vld [vmem:[#allocation13 + $0x38] sm:$0xff]
        %v1364 = vld [vmem:[#allocation13 + $0x40] sm:$0xff]
        %v1365 = vld [vmem:[#allocation13 + $0x48] sm:$0xff]
        %v1366 = vld [vmem:[#allocation13 + $0x50] sm:$0xff]
        %v1367 = vld [vmem:[#allocation13 + $0x58] sm:$0xff]
        %v1368 = vld [vmem:[#allocation13 + $0x60] sm:$0xff]
        %v1369 = vld [vmem:[#allocation13 + $0x68] sm:$0xff]
        %v1370 = vld [vmem:[#allocation13 + $0x70] sm:$0xff]
        %v1371 = vld [vmem:[#allocation13 + $0x78] sm:$0xff]
        %v1372 = vld [vmem:[#allocation13 + $0x80] sm:$0xff]
        %v1373 = vld [vmem:[#allocation13 + $0x88] sm:$0xff]
        %v1374 = vld [vmem:[#allocation13 + $0x90] sm:$0xff]
        %v1375 = vld [vmem:[#allocation13 + $0x98] sm:$0xff]
        %v1376 = vld [vmem:[#allocation13 + $0xa0] sm:$0xff]
        %v1377 = vld [vmem:[#allocation13 + $0xa8] sm:$0xff]
        %v1378 = vld [vmem:[#allocation13 + $0xb0] sm:$0xff]
        %v1379 = vld [vmem:[#allocation13 + $0xb8] sm:$0xff]
        %v1380 = vld [vmem:[#allocation13 + $0xc0] sm:$0xff]
        %v1381 = vld [vmem:[#allocation13 + $0xc8] sm:$0xff]
        %v1382 = vld [vmem:[#allocation13 + $0xd0] sm:$0xff]
        %v1383 = vld [vmem:[#allocation13 + $0xd8] sm:$0xff]
        %v1384 = vld [vmem:[#allocation13 + $0xe0] sm:$0xff]
        %v1385 = vld [vmem:[#allocation13 + $0xe8] sm:$0xff]
        %v1386 = vld [vmem:[#allocation13 + $0xf0] sm:$0xff]
        %v1387 = vld [vmem:[#allocation13 + $0xf8] sm:$0xff]
        %1388 = vmatprep.subr.mxu0 0.0
        %1389 = vmatpush1.msra.mxu0 %v1356
        %1390 = vmatprep.subr.mxu0 0.0
        %1391 = vmatpush1.msra.mxu0 %v1357
        %1392 = vmatprep.subr.mxu0 0.0
        %1393 = vmatpush1.msra.mxu0 %v1358
        %1394 = vmatprep.subr.mxu0 0.0
        %1395 = vmatpush1.msra.mxu0 %v1359
        %1396 = vmatprep.subr.mxu0 0.0
        %1397 = vmatpush1.msra.mxu0 %v1360
        %1398 = vmatprep.subr.mxu0 0.0
        %1399 = vmatpush1.msra.mxu0 %v1361
        %1400 = vmatprep.subr.mxu0 0.0
        %1401 = vmatpush1.msra.mxu0 %v1362
        %1402 = vmatprep.subr.mxu0 0.0
        %1403 = vmatpush1.msra.mxu0 %v1363
        %1404 = vmatprep.subr.mxu0 0.0
        %1405 = vmatpush1.msra.mxu0 %v1364
        %1406 = vmatprep.subr.mxu0 0.0
        %1407 = vmatpush1.msra.mxu0 %v1365
        %1408 = vmatprep.subr.mxu0 0.0
        %1409 = vmatpush1.msra.mxu0 %v1366
        %1410 = vmatprep.subr.mxu0 0.0
        %1411 = vmatpush1.msra.mxu0 %v1367
        %1412 = vmatprep.subr.mxu0 0.0
        %1413 = vmatpush1.msra.mxu0 %v1368
        %1414 = vmatprep.subr.mxu0 0.0
        %1415 = vmatpush1.msra.mxu0 %v1369
        %1416 = vmatprep.subr.mxu0 0.0
        %1417 = vmatpush1.msra.mxu0 %v1370
        %1418 = vmatprep.subr.mxu0 0.0
        %1419 = vmatpush1.msra.mxu0 %v1371
        %1420 = vmatprep.subr.mxu0 0.0
        %1421 = vmatpush1.msra.mxu0 %v1372
        %1422 = vmatprep.subr.mxu0 0.0
        %1423 = vmatpush1.msra.mxu0 %v1373
        %1424 = vmatprep.subr.mxu0 0.0
        %1425 = vmatpush1.msra.mxu0 %v1374
        %1426 = vmatprep.subr.mxu0 0.0
        %1427 = vmatpush1.msra.mxu0 %v1375
        %1428 = vmatprep.subr.mxu0 0.0
        %1429 = vmatpush1.msra.mxu0 %v1376
        %1430 = vmatprep.subr.mxu0 0.0
        %1431 = vmatpush1.msra.mxu0 %v1377
        %1432 = vmatprep.subr.mxu0 0.0
        %1433 = vmatpush1.msra.mxu0 %v1378
        %1434 = vmatprep.subr.mxu0 0.0
        %1435 = vmatpush1.msra.mxu0 %v1379
        %1436 = vmatprep.subr.mxu0 0.0
        %1437 = vmatpush1.msra.mxu0 %v1380
        %1438 = vmatprep.subr.mxu0 0.0
        %1439 = vmatpush1.msra.mxu0 %v1381
        %1440 = vmatprep.subr.mxu0 0.0
        %1441 = vmatpush1.msra.mxu0 %v1382
        %1442 = vmatprep.subr.mxu0 0.0
        %1443 = vmatpush1.msra.mxu0 %v1383
        %1444 = vmatprep.subr.mxu0 0.0
        %1445 = vmatpush1.msra.mxu0 %v1384
        %1446 = vmatprep.subr.mxu0 0.0
        %1447 = vmatpush1.msra.mxu0 %v1385
        %1448 = vmatprep.subr.mxu0 0.0
        %1449 = vmatpush1.msra.mxu0 %v1386
        %1450 = vmatprep.subr.mxu0 0.0
        %1451 = vmatpush1.msra.mxu0 %v1387
        %1452 = vmatprep.mubr.f32.mxu0 %v1355
        %1453 = vmatmul.mubr.f32.gmra.mrb[0].mxu0 %v1354
        %v1454 = vpop.f32.mrb[0].mxu0
        %v1455 = vadd.f32 %v518, %v1454
        %v1456 = vpop.f32.mrb[0].mxu0
        %1457 = vdwg.mxu0
        %v1458 = vadd.f32 %v1239, %v1455
        %1459 = vmatprep.subr.mxu0 0.0
        %1460 = vmatpush1.msra.mxu0 %v542
        %1461 = vmatprep.subr.mxu0 0.0
        %1462 = vmatpush1.msra.mxu0 %v543
        %1463 = vmatprep.subr.mxu0 0.0
        %1464 = vmatpush1.msra.mxu0 %v544
        %1465 = vmatprep.subr.mxu0 0.0
        %1466 = vmatpush1.msra.mxu0 %v545
        %1467 = vmatprep.subr.mxu0 0.0
        %1468 = vmatpush1.msra.mxu0 %v546
        %1469 = vmatprep.subr.mxu0 0.0
        %1470 = vmatpush1.msra.mxu0 %v547
        %1471 = vmatprep.subr.mxu0 0.0
        %1472 = vmatpush1.msra.mxu0 %v548
        %1473 = vmatprep.subr.mxu0 0.0
        %1474 = vmatpush1.msra.mxu0 %v549
        %1475 = vmatprep.subr.mxu0 0.0
        %1476 = vmatpush1.msra.mxu0 %v550
        %1477 = vmatprep.subr.mxu0 0.0
        %1478 = vmatpush1.msra.mxu0 %v551
        %1479 = vmatprep.subr.mxu0 0.0
        %1480 = vmatpush1.msra.mxu0 %v552
        %1481 = vmatprep.subr.mxu0 0.0
        %1482 = vmatpush1.msra.mxu0 %v553
        %1483 = vmatprep.subr.mxu0 0.0
        %1484 = vmatpush1.msra.mxu0 %v554
        %1485 = vmatprep.subr.mxu0 0.0
        %1486 = vmatpush1.msra.mxu0 %v555
        %1487 = vmatprep.subr.mxu0 0.0
        %1488 = vmatpush1.msra.mxu0 %v556
        %1489 = vmatprep.subr.mxu0 0.0
        %1490 = vmatpush1.msra.mxu0 %v557
        %1491 = vmatprep.subr.mxu0 0.0
        %1492 = vmatpush1.msra.mxu0 0.0
        %1493 = vmatprep.subr.mxu0 0.0
        %1494 = vmatpush1.msra.mxu0 0.0
        %1495 = vmatprep.subr.mxu0 0.0
        %1496 = vmatpush1.msra.mxu0 0.0
        %1497 = vmatprep.subr.mxu0 0.0
        %1498 = vmatpush1.msra.mxu0 0.0
        %1499 = vmatprep.subr.mxu0 0.0
        %1500 = vmatpush1.msra.mxu0 0.0
        %1501 = vmatprep.subr.mxu0 0.0
        %1502 = vmatpush1.msra.mxu0 0.0
        %1503 = vmatprep.subr.mxu0 0.0
        %1504 = vmatpush1.msra.mxu0 0.0
        %1505 = vmatprep.subr.mxu0 0.0
        %1506 = vmatpush1.msra.mxu0 0.0
        %1507 = vmatprep.subr.mxu0 0.0
        %1508 = vmatpush1.msra.mxu0 0.0
        %1509 = vmatprep.subr.mxu0 0.0
        %1510 = vmatpush1.msra.mxu0 0.0
        %1511 = vmatprep.subr.mxu0 0.0
        %1512 = vmatpush1.msra.mxu0 0.0
        %1513 = vmatprep.subr.mxu0 0.0
        %1514 = vmatpush1.msra.mxu0 0.0
        %1515 = vmatprep.subr.mxu0 0.0
        %1516 = vmatpush1.msra.mxu0 0.0
        %1517 = vmatprep.subr.mxu0 0.0
        %1518 = vmatpush1.msra.mxu0 0.0
        %1519 = vmatprep.subr.mxu0 0.0
        %1520 = vmatpush1.msra.mxu0 0.0
        %1521 = vmatprep.subr.mxu0 0.0
        %1522 = vmatpush1.msra.mxu0 0.0
        %1523 = vmatprep.mubr.f32.mxu0 0.0
        %1524 = vmatmul.mubr.f32.gmra.mrb[0].mxu0 %v1458
        %v1525 = vpop.f32.mrb[0].mxu0
        %v1526 = vadd.f32 0.0, %v1525
        %v1527 = vpop.f32.mrb[0].mxu0
        %1528 = vdwg.mxu0
        %v1529 = vsub.f32 %v1458, %v1526
        %v1530 = vmul.f32 %v1529, %v1529
        %1531 = vmatprep.subr.mxu0 0.0
        %1532 = vmatpush1.msra.mxu0 %v542
        %1533 = vmatprep.subr.mxu0 0.0
        %1534 = vmatpush1.msra.mxu0 %v543
        %1535 = vmatprep.subr.mxu0 0.0
        %1536 = vmatpush1.msra.mxu0 %v544
        %1537 = vmatprep.subr.mxu0 0.0
        %1538 = vmatpush1.msra.mxu0 %v545
        %1539 = vmatprep.subr.mxu0 0.0
        %1540 = vmatpush1.msra.mxu0 %v546
        %1541 = vmatprep.subr.mxu0 0.0
        %1542 = vmatpush1.msra.mxu0 %v547
        %1543 = vmatprep.subr.mxu0 0.0
        %1544 = vmatpush1.msra.mxu0 %v548
        %1545 = vmatprep.subr.mxu0 0.0
        %1546 = vmatpush1.msra.mxu0 %v549
        %1547 = vmatprep.subr.mxu0 0.0
        %1548 = vmatpush1.msra.mxu0 %v550
        %1549 = vmatprep.subr.mxu0 0.0
        %1550 = vmatpush1.msra.mxu0 %v551
        %1551 = vmatprep.subr.mxu0 0.0
        %1552 = vmatpush1.msra.mxu0 %v552
        %1553 = vmatprep.subr.mxu0 0.0
        %1554 = vmatpush1.msra.mxu0 %v553
        %1555 = vmatprep.subr.mxu0 0.0
        %1556 = vmatpush1.msra.mxu0 %v554
        %1557 = vmatprep.subr.mxu0 0.0
        %1558 = vmatpush1.msra.mxu0 %v555
        %1559 = vmatprep.subr.mxu0 0.0
        %1560 = vmatpush1.msra.mxu0 %v556
        %1561 = vmatprep.subr.mxu0 0.0
        %1562 = vmatpush1.msra.mxu0 %v557
        %1563 = vmatprep.subr.mxu0 0.0
        %1564 = vmatpush1.msra.mxu0 0.0
        %1565 = vmatprep.subr.mxu0 0.0
        %1566 = vmatpush1.msra.mxu0 0.0
        %1567 = vmatprep.subr.mxu0 0.0
        %1568 = vmatpush1.msra.mxu0 0.0
        %1569 = vmatprep.subr.mxu0 0.0
        %1570 = vmatpush1.msra.mxu0 0.0
        %1571 = vmatprep.subr.mxu0 0.0
        %1572 = vmatpush1.msra.mxu0 0.0
        %1573 = vmatprep.subr.mxu0 0.0
        %1574 = vmatpush1.msra.mxu0 0.0
        %1575 = vmatprep.subr.mxu0 0.0
        %1576 = vmatpush1.msra.mxu0 0.0
        %1577 = vmatprep.subr.mxu0 0.0
        %1578 = vmatpush1.msra.mxu0 0.0
        %1579 = vmatprep.subr.mxu0 0.0
        %1580 = vmatpush1.msra.mxu0 0.0
        %1581 = vmatprep.subr.mxu0 0.0
        %1582 = vmatpush1.msra.mxu0 0.0
        %1583 = vmatprep.subr.mxu0 0.0
        %1584 = vmatpush1.msra.mxu0 0.0
        %1585 = vmatprep.subr.mxu0 0.0
        %1586 = vmatpush1.msra.mxu0 0.0
        %1587 = vmatprep.subr.mxu0 0.0
        %1588 = vmatpush1.msra.mxu0 0.0
        %1589 = vmatprep.subr.mxu0 0.0
        %1590 = vmatpush1.msra.mxu0 0.0
        %1591 = vmatprep.subr.mxu0 0.0
        %1592 = vmatpush1.msra.mxu0 0.0
        %1593 = vmatprep.subr.mxu0 0.0
        %1594 = vmatpush1.msra.mxu0 0.0
        %1595 = vmatprep.mubr.f32.mxu0 0.0
        %1596 = vmatmul.mubr.f32.gmra.mrb[0].mxu0 %v1530
        %v1597 = vpop.f32.mrb[0].mxu0
        %v1598 = vadd.f32 1e-05, %v1597
        %v1599 = vpop.f32.mrb[0].mxu0
        %1600 = vdwg.mxu0
        %v1601 = vrsqrt.pop %v1598
        %v1602 = vmul.f32 %v1529, %v1601
        %v1603 = vmul.f32 %v1602, %v521
        %v1604 = vadd.f32 %v1603, %v522
        %1605 = vst [vmem:[%s512] sm:$0xff] %v1604
        %s1606 = sand.u32 %s261, 1
        %s1607 = scalar_lea.sflag [#allocation4], %s1606
        %s1608 = sand.u32 %s261, 1
        %s1609 = smul.addr %s1608, 8
        %s1610 = scalar_lea.vmem [#allocation17], %s1609
        // Predicated region
        $region97: #{tpu_custom_call.1} parent=59 // pred_check
          %p1611 = pneg %p271
        $region98: #{tpu_custom_call.1} parent=59 // pred_check_branch
          %1613 = sbr.rel (%p1611) target = $region100
        $region99: #{tpu_custom_call.1} parent=59 // pred_region
          %s1615 = ssub.s32 128, 128
          %1616 = vsyncadd %s1607, %s1615
          %s1617 = smul.addr %s33, 128
          %s1618 = scalar_lea.hbm %s10, %s1617
          %s1620 = sshll.u32 %s1610, 4
          %s1621 = int_to_ptr.vmem [resolvable:$true] %s1620
          %1623 = dma.vmem_to_hbm [thread:$0]  %s1621, 128, %s1618, %s1607
        $region100: #{tpu_custom_call.1} parent=59 // pred_fallthru
          _
      $region60: #{tpu_custom_call.1} parent=5 // pred_fallthru
        _
      %p1624 = scmp.le.s32.totalorder 2, %s28
      // Predicated region
      $region101: #{tpu_custom_call.1} parent=5 // pred_check
        %p1625 = pneg %p1624
      $region102: #{tpu_custom_call.1} parent=5 // pred_check_branch
        %1627 = sbr.rel (%p1625) target = $region104
      $region103: #{tpu_custom_call.1} parent=5 // pred_region
        %s1628 = ssub.s32 %s28, 2
        // Predicated region
        $region105: #{tpu_custom_call.1} parent=103 // pred_check
          %p1629 = pneg %p277
        $region106: #{tpu_custom_call.1} parent=103 // pred_check_branch
          %1631 = sbr.rel (%p1629) target = $region108
        $region107: #{tpu_custom_call.1} parent=103 // pred_region
          %s1632 = sand.u32 %s262, 1
          %s1633 = scalar_lea.sflag [#allocation4], %s1632
          %s1634 = sand.u32 %s262, 1
          %s1635 = smul.addr %s1634, 8
          %s1636 = scalar_lea.vmem [#allocation17], %s1635
          %1637 = dma.done %s1633, 128
        $region108: #{tpu_custom_call.1} parent=103 // pred_fallthru
          _
      $region104: #{tpu_custom_call.1} parent=5 // pred_fallthru
        _
    $region6: #{tpu_custom_call.1} parent=1 // loop_footer
      %s32 = sadd.s32 1, %s28
    $region7: #{tpu_custom_call.1} parent=1 // loop_footer_branch
      %27 = sbr.rel target = $region3
    $region8: #{tpu_custom_call.1} parent=1 // loop_exit
      _
    %1638 = vsyncpa [#allocation3], 1
    %s1639 = scalar_lea.sflag [#allocation3], 1
    %1640 = vsyncpa %s1639, 1
    %1641 = vsyncpa [#allocation6], 1
    %s1642 = scalar_lea.sflag [#allocation6], 1
    %1643 = vsyncpa %s1642, 1
    %1644 = vsyncpa [#allocation9], 1
    %1645 = vsyncpa [#allocation12], 1
    %1646 = vsyncpa [#allocation15], 1
    %1647 = vsyncpa [#allocation4], 1
    %s1648 = scalar_lea.sflag [#allocation4], 1
    %1649 = vsyncpa %s1648, 1

</llo_original>
